<compile_context>
chip_gen: v7x
topology: tpu7x:2x2x1
jax: 0.10.0
libtpu: 0.0.40
codegen_flags: <defaults>
</compile_context>

<pallas_src>
import functools

import jax
import jax.numpy as jnp
from jax.experimental import pallas as pl
from jax.experimental.pallas import tpu as pltpu


# ---------------------------------------------------------------------------
# Fused Pallas kernel: expand (1x1) -> depthwise 3x3 (stride s) -> project (1x1)
# ---------------------------------------------------------------------------

def _bottleneck_kernel(x_ref, w1_ref, b1_ref, wdw_ref, b2_ref, w3_ref, b3_ref,
                       o_ref, hp_ref, *, stride, use_shortcut, Ho, Wo):
    f32 = jnp.float32
    Cmid = w1_ref.shape[1]

    # ---- stage 1: 1x1 expand (MXU, bf16 operands, f32 acc) + bias + ReLU ----
    h1 = jnp.dot(x_ref[...], w1_ref[...], preferred_element_type=f32)
    h1 = jnp.maximum(h1 + b1_ref[...], 0.0)           # (rows, Cmid) f32, VMEM only

    # ---- stage h1 into the zero-padded depthwise-input scratch (VMEM) -------
    hp_ref[...] = jnp.zeros_like(hp_ref)              # borders = conv zero-pad
    if stride == 2:
        # hp_ref[pr, pc, qr, qc, :] == padded_h1[2*qr + pr, 2*qc + pc, :]
        hw = Ho * Wo

        def par(i):  # parity block (pr, pc) = divmod(i, 2) of the h1 rows
            return h1[i * hw:(i + 1) * hw, :].reshape(Ho, Wo, Cmid)

        hp_ref[1, 1, 0:Ho, 0:Wo, :] = par(0)               # h1 parity (0, 0)
        hp_ref[1, 0, 0:Ho, 1:Wo + 1, :] = par(1)           # h1 parity (0, 1)
        hp_ref[0, 1, 1:Ho + 1, 0:Wo, :] = par(2)           # h1 parity (1, 0)
        hp_ref[0, 0, 1:Ho + 1, 1:Wo + 1, :] = par(3)       # h1 parity (1, 1)
    else:
        hp_ref[1:Ho + 1, 1:Wo + 1, :] = h1.reshape(Ho, Wo, Cmid)

    # ---- stage 2: 3x3 depthwise (VPU, f32), ONLY strided outputs ------------
    w = wdw_ref[...].astype(f32)                      # (3, 3, Cmid), BN-folded
    acc = jnp.zeros((Ho, Wo, Cmid), f32)
    for kh in range(3):
        for kw in range(3):
            if stride == 2:
                # output (oh, ow) tap = padded[2*oh + kh, 2*ow + kw]
                tap = hp_ref[kh % 2, kw % 2,
                             kh // 2:kh // 2 + Ho,
                             kw // 2:kw // 2 + Wo, :]
            else:
                tap = hp_ref[kh:kh + Ho, kw:kw + Wo, :]
            acc = acc + tap * w[kh, kw]
    h2 = jnp.maximum(acc + b2_ref[...], 0.0)          # (Ho, Wo, Cmid) f32

    # ---- stage 3: 1x1 project (MXU) + bias (+ residual) ---------------------
    y = jnp.dot(h2.reshape(Ho * Wo, Cmid).astype(jnp.bfloat16), w3_ref[...],
                preferred_element_type=f32)
    y = y + b3_ref[...]
    if use_shortcut:                                  # stride == 1, Cin == Cout
        y = y + x_ref[...].astype(f32)
    o_ref[...] = y.astype(o_ref.dtype)


# ---------------------------------------------------------------------------
# Wrapper
# ---------------------------------------------------------------------------

def _fold_params(params):
    """Fold eval-mode BN into the conv weights; bf16-cast the MXU weights."""
    f32 = jnp.float32
    w1s = (params["w1"] * params["s1"][None, :]).astype(jnp.bfloat16)
    wdws = (params["wdw"] * params["s2"][None, None, :]).astype(f32)
    w3s = (params["w3"] * params["s3"][None, :]).astype(jnp.bfloat16)
    b1 = params["b1"].reshape(1, -1).astype(f32)
    b2 = params["b2"].reshape(1, -1).astype(f32)
    b3 = params["b3"].reshape(1, -1).astype(f32)
    return w1s, b1, wdws, b2, w3s, b3


@functools.partial(jax.jit, static_argnames=("stride", "use_shortcut"))
def linear_bottleneck(x_nchw, params, *, stride, use_shortcut):
    assert stride in (1, 2), "kernel covers the module's stride=1/2 cases"
    if use_shortcut:
        assert stride == 1, "shortcut requires stride == 1 (module invariant)"

    x = jnp.transpose(x_nchw, (0, 2, 3, 1))            # NCHW -> NHWC (C on lanes)
    N, H, W, Cin = x.shape
    w1s, b1, wdws, b2, w3s, b3 = _fold_params(params)
    Cmid, Cout = w1s.shape[1], w3s.shape[1]
    if use_shortcut:
        assert Cin == Cout

    if stride == 2:
        assert H % 2 == 0 and W % 2 == 0, "stride-2 path assumes even H, W"
        Ho, Wo = H // 2, W // 2
        # Parity-deinterleave the *small* Cin-wide input in XLA so the in-kernel
        # strided depthwise taps become contiguous slices.
        # Flattened rows are ordered (pr, pc, qr, qc): x[n, 2*qr+pr, 2*qc+pc, :].
        x_flat = (x.reshape(N, Ho, 2, Wo, 2, Cin)
                   .transpose(0, 2, 4, 1, 3, 5)
                   .reshape(N, 4 * Ho * Wo, Cin))
        scratch = pltpu.VMEM((2, 2, Ho + 1, Wo + 1, Cmid), jnp.float32)
    else:
        Ho, Wo = H, W
        x_flat = x.reshape(N, H * W, Cin)
        scratch = pltpu.VMEM((H + 2, W + 2, Cmid), jnp.float32)

    x_flat = x_flat.astype(jnp.bfloat16)               # bf16 MXU operands
    rows = x_flat.shape[1]

    kernel = functools.partial(_bottleneck_kernel, stride=stride,
                               use_shortcut=use_shortcut, Ho=Ho, Wo=Wo)

    out = pl.pallas_call(
        kernel,
        out_shape=jax.ShapeDtypeStruct((N, Ho * Wo, Cout), jnp.float32),
        grid_spec=pltpu.PrefetchScalarGridSpec(
            num_scalar_prefetch=0,
            grid=(N,),
            in_specs=[
                pl.BlockSpec((None, rows, Cin), lambda n: (n, 0, 0)),
                pl.BlockSpec((Cin, Cmid), lambda n: (0, 0)),
                pl.BlockSpec((1, Cmid), lambda n: (0, 0)),
                pl.BlockSpec((3, 3, Cmid), lambda n: (0, 0, 0)),
                pl.BlockSpec((1, Cmid), lambda n: (0, 0)),
                pl.BlockSpec((Cmid, Cout), lambda n: (0, 0)),
                pl.BlockSpec((1, Cout), lambda n: (0, 0)),
            ],
            out_specs=pl.BlockSpec((None, Ho * Wo, Cout), lambda n: (n, 0, 0)),
            scratch_shapes=[scratch],
        ),
        compiler_params=pltpu.CompilerParams(
            dimension_semantics=("parallel",)),
    )(x_flat, w1s, b1, wdws, b2, w3s, b3)

    out = out.reshape(N, Ho, Wo, Cout)
    return jnp.transpose(out, (0, 3, 1, 2))            # NHWC -> NCHW


# ---------------------------------------------------------------------------
# Pure-JAX reference (mirrors the kernel's bf16 operand rounding)
# ---------------------------------------------------------------------------

def _depthwise_ref(h1, wdw, stride):
    N, H, W, C = h1.shape
    Ho = (H - 1) // stride + 1
    Wo = (W - 1) // stride + 1
    hp = jnp.pad(h1, ((0, 0), (1, 1), (1, 1), (0, 0)))
    acc = jnp.zeros((N, Ho, Wo, C), jnp.float32)
    for kh in range(3):
        for kw in range(3):
            sl = hp[:, kh:kh + (Ho - 1) * stride + 1:stride,
                       kw:kw + (Wo - 1) * stride + 1:stride, :]
            acc = acc + sl * wdw[kh, kw]
    return acc


def linear_bottleneck_ref(x_nchw, params, *, stride, use_shortcut):
    f32 = jnp.float32
    hi = jax.lax.Precision.HIGHEST
    x = jnp.transpose(x_nchw, (0, 2, 3, 1)).astype(f32)
    w1s, b1, wdws, b2, w3s, b3 = _fold_params(params)
    xb = x.astype(jnp.bfloat16).astype(f32)
    h1 = jnp.maximum(
        jnp.einsum('nhwc,cd->nhwd', xb, w1s.astype(f32), precision=hi) + b1[0],
        0.0)
    h2 = jnp.maximum(_depthwise_ref(h1, wdws, stride) + b2[0], 0.0)
    h2b = h2.astype(jnp.bfloat16).astype(f32)
    y = jnp.einsum('nhwc,cd->nhwd', h2b, w3s.astype(f32), precision=hi) + b3[0]
    if use_shortcut:
        y = y + xb
    return jnp.transpose(y, (0, 3, 1, 2))


# ---------------------------------------------------------------------------
# Deterministic parameter init (weights match the torch layer shapes, transposed
# to channels-last matmul form; BN running stats folded to scale/bias)
# ---------------------------------------------------------------------------

def _bn_fold(kg, kb, km, kv, c, eps=1e-5):
    gamma = 1.0 + 0.1 * jax.random.normal(kg, (c,), jnp.float32)
    beta = 0.1 * jax.random.normal(kb, (c,), jnp.float32)
    mean = 0.1 * jax.random.normal(km, (c,), jnp.float32)
    var = jnp.abs(jax.random.normal(kv, (c,), jnp.float32)) + 0.5
    scale = gamma / jnp.sqrt(var + eps)
    bias = beta - mean * scale
    return scale, bias


def init_params(key, cin, cout, t):
    cmid = cin * t
    ks = jax.random.split(key, 15)
    w1 = 0.1 * jax.random.normal(ks[0], (cin, cmid), jnp.float32)    # torch (cmid,cin,1,1)
    wdw = 0.1 * jax.random.normal(ks[1], (3, 3, cmid), jnp.float32)  # torch (cmid,1,3,3)
    w3 = 0.1 * jax.random.normal(ks[2], (cmid, cout), jnp.float32)   # torch (cout,cmid,1,1)
    s1, b1 = _bn_fold(ks[3], ks[4], ks[5], ks[6], cmid)
    s2, b2 = _bn_fold(ks[7], ks[8], ks[9], ks[10], cmid)
    s3, b3 = _bn_fold(ks[11], ks[12], ks[13], ks[14], cout)
    return dict(w1=w1, wdw=wdw, w3=w3, s1=s1, b1=b1, s2=s2, b2=b2, s3=s3, b3=b3)


# ---------------------------------------------------------------------------

if __name__ == "__main__":
    key = jax.random.PRNGKey(0)
    k1, k2, k3, k4 = jax.random.split(key, 4)

    # Config 1: module defaults (t=6, stride=2, in=4 -> out=8), no shortcut.
    N, Cin, H, W, Cout, t, stride = 2, 4, 16, 16, 8, 6, 2
    use_shortcut = (stride == 1 and Cin == Cout)                  # False
    x = jax.random.normal(k1, (N, Cin, H, W), jnp.float32)        # NCHW like torch
    params = init_params(k2, Cin, Cout, t)
    out = jax.block_until_ready(
        linear_bottleneck(x, params, stride=stride, use_shortcut=use_shortcut))
    assert out.shape == (N, Cout, H // stride, W // stride), out.shape
    assert jnp.all(jnp.isfinite(out))
    ref = linear_bottleneck_ref(x, params, stride=stride, use_shortcut=use_shortcut)
    assert jnp.allclose(out, ref, atol=5e-2, rtol=5e-2), \
        float(jnp.max(jnp.abs(out - ref)))

    # Config 2: stride=1 with residual shortcut (in == out == 4).
    x2 = jax.random.normal(k3, (2, 4, 16, 16), jnp.float32)
    params2 = init_params(k4, 4, 4, 6)
    out2 = jax.block_until_ready(
        linear_bottleneck(x2, params2, stride=1, use_shortcut=True))
    assert out2.shape == (2, 4, 16, 16), out2.shape
    ref2 = linear_bottleneck_ref(x2, params2, stride=1, use_shortcut=True)
    assert jnp.allclose(out2, ref2, atol=5e-2, rtol=5e-2), \
        float(jnp.max(jnp.abs(out2 - ref2)))

    print("KERNEL_OK")
</pallas_src>

<mosaic_0001>
module attributes {stable_mosaic.version = 11 : i64} {
  func.func @_bottleneck_kernel(%arg0: i32, %arg1: memref<1x256x4xbf16, #tpu.memory_space<vmem>>, %arg2: memref<4x24xbf16, #tpu.memory_space<vmem>>, %arg3: memref<1x24xf32, #tpu.memory_space<vmem>>, %arg4: memref<3x3x24xf32, #tpu.memory_space<vmem>>, %arg5: memref<1x24xf32, #tpu.memory_space<vmem>>, %arg6: memref<24x8xbf16, #tpu.memory_space<vmem>>, %arg7: memref<1x8xf32, #tpu.memory_space<vmem>>, %arg8: memref<1x64x8xf32, #tpu.memory_space<vmem>>, %arg9: memref<2x2x9x9x24xf32, #tpu.memory_space<vmem>>) attributes {dimension_semantics = [#tpu.dimension_semantics<parallel>], iteration_bounds = array<i64: 2>, scalar_prefetch = 0 : i64, scratch_operands = 1 : i64, tpu.core_type = #tpu.core_type<tc>, window_params = [{transform_indices = @transform_0, window_bounds = array<i64: 1, 256, 4>}, {pipeline_mode = #tpu.pipeline_mode<synchronous>, transform_indices = @transform_1, window_bounds = array<i64: 4, 24>}, {pipeline_mode = #tpu.pipeline_mode<synchronous>, transform_indices = @transform_2, window_bounds = array<i64: 1, 24>}, {pipeline_mode = #tpu.pipeline_mode<synchronous>, transform_indices = @transform_3, window_bounds = array<i64: 3, 3, 24>}, {pipeline_mode = #tpu.pipeline_mode<synchronous>, transform_indices = @transform_4, window_bounds = array<i64: 1, 24>}, {pipeline_mode = #tpu.pipeline_mode<synchronous>, transform_indices = @transform_5, window_bounds = array<i64: 24, 8>}, {pipeline_mode = #tpu.pipeline_mode<synchronous>, transform_indices = @transform_6, window_bounds = array<i64: 1, 8>}, {transform_indices = @transform_7, window_bounds = array<i64: 1, 64, 8>}]} {
    %c0 = arith.constant 0 : index
    %c0_0 = arith.constant 0 : index
    %c0_1 = arith.constant 0 : index
    %0 = vector.load %arg1[%c0, %c0_0, %c0_1] : memref<1x256x4xbf16, #tpu.memory_space<vmem>>, vector<1x256x4xbf16>
    %1 = vector.shape_cast %0 : vector<1x256x4xbf16> to vector<256x4xbf16>
    %c0_2 = arith.constant 0 : index
    %c0_3 = arith.constant 0 : index
    %2 = vector.load %arg2[%c0_2, %c0_3] : memref<4x24xbf16, #tpu.memory_space<vmem>>, vector<4x24xbf16>
    %cst = arith.constant dense<0.000000e+00> : vector<256x24xf32>
    %3 = tpu.matmul %1, %2, %cst {dimension_numbers = #tpu.dot_dimension_numbers<[1], [0], [0], [1], [0, 0, 1, 1], [], []>} : vector<256x4xbf16>, vector<4x24xbf16>, vector<256x24xf32> -> vector<256x24xf32>
    %c0_4 = arith.constant 0 : index
    %c0_5 = arith.constant 0 : index
    %4 = vector.load %arg3[%c0_4, %c0_5] : memref<1x24xf32, #tpu.memory_space<vmem>>, vector<1x24xf32>
    %5 = vector.broadcast %4 : vector<1x24xf32> to vector<256x24xf32>
    %6 = arith.addf %3, %5 : vector<256x24xf32>
    %cst_6 = arith.constant 0.000000e+00 : f32
    %7 = vector.broadcast %cst_6 : f32 to vector<256x24xf32>
    %8 = arith.maximumf %6, %7 : vector<256x24xf32>
    %cst_7 = arith.constant 0.000000e+00 : f32
    %9 = vector.broadcast %cst_7 : f32 to vector<2x2x9x9x24xf32>
    %c0_8 = arith.constant 0 : index
    %c0_9 = arith.constant 0 : index
    %c0_10 = arith.constant 0 : index
    %c0_11 = arith.constant 0 : index
    %c0_12 = arith.constant 0 : index
    %10 = vector.load %arg9[%c0_8, %c0_9, %c0_10, %c0_11, %c0_12] : memref<2x2x9x9x24xf32, #tpu.memory_space<vmem>>, vector<2x2x9x9x24xf32>
    tpu.vector_store %arg9[%c0_8, %c0_9, %c0_10, %c0_11, %c0_12], %9 {strides = array<i32>} : memref<2x2x9x9x24xf32, #tpu.memory_space<vmem>>, vector<2x2x9x9x24xf32>,
    %11 = vector.extract_strided_slice %8 {offsets = [0, 0], sizes = [64, 24], strides = [1, 1]} : vector<256x24xf32> to vector<64x24xf32>
    %12 = vector.shape_cast %11 : vector<64x24xf32> to vector<8x8x24xf32>
    %c1 = arith.constant 1 : index
    %c1_13 = arith.constant 1 : index
    %c0_14 = arith.constant 0 : index
    %c0_15 = arith.constant 0 : index
    %c0_16 = arith.constant 0 : index
    %13 = vector.load %arg9[%c1, %c1_13, %c0_14, %c0_15, %c0_16] : memref<2x2x9x9x24xf32, #tpu.memory_space<vmem>>, vector<1x1x8x8x24xf32>
    %14 = vector.shape_cast %13 : vector<1x1x8x8x24xf32> to vector<8x8x24xf32>
    %15 = vector.shape_cast %12 : vector<8x8x24xf32> to vector<1x1x8x8x24xf32>
    tpu.vector_store %arg9[%c1, %c1_13, %c0_14, %c0_15, %c0_16], %15 {strides = array<i32>} : memref<2x2x9x9x24xf32, #tpu.memory_space<vmem>>, vector<1x1x8x8x24xf32>,
    %16 = vector.extract_strided_slice %8 {offsets = [64, 0], sizes = [64, 24], strides = [1, 1]} : vector<256x24xf32> to vector<64x24xf32>
    %17 = vector.shape_cast %16 : vector<64x24xf32> to vector<8x8x24xf32>
    %c1_17 = arith.constant 1 : index
    %c0_18 = arith.constant 0 : index
    %c0_19 = arith.constant 0 : index
    %c1_20 = arith.constant 1 : index
    %c0_21 = arith.constant 0 : index
    %18 = vector.load %arg9[%c1_17, %c0_18, %c0_19, %c1_20, %c0_21] : memref<2x2x9x9x24xf32, #tpu.memory_space<vmem>>, vector<1x1x8x8x24xf32>
    %19 = vector.shape_cast %18 : vector<1x1x8x8x24xf32> to vector<8x8x24xf32>
    %20 = vector.shape_cast %17 : vector<8x8x24xf32> to vector<1x1x8x8x24xf32>
    tpu.vector_store %arg9[%c1_17, %c0_18, %c0_19, %c1_20, %c0_21], %20 {strides = array<i32>} : memref<2x2x9x9x24xf32, #tpu.memory_space<vmem>>, vector<1x1x8x8x24xf32>,
    %21 = vector.extract_strided_slice %8 {offsets = [128, 0], sizes = [64, 24], strides = [1, 1]} : vector<256x24xf32> to vector<64x24xf32>
    %22 = vector.shape_cast %21 : vector<64x24xf32> to vector<8x8x24xf32>
    %c0_22 = arith.constant 0 : index
    %c1_23 = arith.constant 1 : index
    %c1_24 = arith.constant 1 : index
    %c0_25 = arith.constant 0 : index
    %c0_26 = arith.constant 0 : index
    %23 = vector.load %arg9[%c0_22, %c1_23, %c1_24, %c0_25, %c0_26] : memref<2x2x9x9x24xf32, #tpu.memory_space<vmem>>, vector<1x1x8x8x24xf32>
    %24 = vector.shape_cast %23 : vector<1x1x8x8x24xf32> to vector<8x8x24xf32>
    %25 = vector.shape_cast %22 : vector<8x8x24xf32> to vector<1x1x8x8x24xf32>
    tpu.vector_store %arg9[%c0_22, %c1_23, %c1_24, %c0_25, %c0_26], %25 {strides = array<i32>} : memref<2x2x9x9x24xf32, #tpu.memory_space<vmem>>, vector<1x1x8x8x24xf32>,
    %26 = vector.extract_strided_slice %8 {offsets = [192, 0], sizes = [64, 24], strides = [1, 1]} : vector<256x24xf32> to vector<64x24xf32>
    %27 = vector.shape_cast %26 : vector<64x24xf32> to vector<8x8x24xf32>
    %c0_27 = arith.constant 0 : index
    %c0_28 = arith.constant 0 : index
    %c1_29 = arith.constant 1 : index
    %c1_30 = arith.constant 1 : index
    %c0_31 = arith.constant 0 : index
    %28 = vector.load %arg9[%c0_27, %c0_28, %c1_29, %c1_30, %c0_31] : memref<2x2x9x9x24xf32, #tpu.memory_space<vmem>>, vector<1x1x8x8x24xf32>
    %29 = vector.shape_cast %28 : vector<1x1x8x8x24xf32> to vector<8x8x24xf32>
    %30 = vector.shape_cast %27 : vector<8x8x24xf32> to vector<1x1x8x8x24xf32>
    tpu.vector_store %arg9[%c0_27, %c0_28, %c1_29, %c1_30, %c0_31], %30 {strides = array<i32>} : memref<2x2x9x9x24xf32, #tpu.memory_space<vmem>>, vector<1x1x8x8x24xf32>,
    %c0_32 = arith.constant 0 : index
    %c0_33 = arith.constant 0 : index
    %c0_34 = arith.constant 0 : index
    %31 = vector.load %arg4[%c0_32, %c0_33, %c0_34] : memref<3x3x24xf32, #tpu.memory_space<vmem>>, vector<3x3x24xf32>
    %cst_35 = arith.constant 0.000000e+00 : f32
    %32 = vector.broadcast %cst_35 : f32 to vector<8x8x24xf32>
    %c0_36 = arith.constant 0 : index
    %c0_37 = arith.constant 0 : index
    %c0_38 = arith.constant 0 : index
    %c0_39 = arith.constant 0 : index
    %c0_40 = arith.constant 0 : index
    %33 = vector.load %arg9[%c0_36, %c0_37, %c0_38, %c0_39, %c0_40] : memref<2x2x9x9x24xf32, #tpu.memory_space<vmem>>, vector<1x1x8x8x24xf32>
    %34 = vector.shape_cast %33 : vector<1x1x8x8x24xf32> to vector<8x8x24xf32>
    %35 = vector.extract_strided_slice %31 {offsets = [0, 0, 0], sizes = [1, 1, 24], strides = [1, 1, 1]} : vector<3x3x24xf32> to vector<1x1x24xf32>
    %36 = vector.shape_cast %35 : vector<1x1x24xf32> to vector<24xf32>
    %37 = vector.shape_cast %36 : vector<24xf32> to vector<1x1x24xf32>
    %38 = vector.broadcast %37 : vector<1x1x24xf32> to vector<8x8x24xf32>
    %39 = arith.mulf %34, %38 : vector<8x8x24xf32>
    %40 = arith.addf %32, %39 : vector<8x8x24xf32>
    %c0_41 = arith.constant 0 : index
    %c1_42 = arith.constant 1 : index
    %c0_43 = arith.constant 0 : index
    %c0_44 = arith.constant 0 : index
    %c0_45 = arith.constant 0 : index
    %41 = vector.load %arg9[%c0_41, %c1_42, %c0_43, %c0_44, %c0_45] : memref<2x2x9x9x24xf32, #tpu.memory_space<vmem>>, vector<1x1x8x8x24xf32>
    %42 = vector.shape_cast %41 : vector<1x1x8x8x24xf32> to vector<8x8x24xf32>
    %43 = vector.extract_strided_slice %31 {offsets = [0, 1, 0], sizes = [1, 1, 24], strides = [1, 1, 1]} : vector<3x3x24xf32> to vector<1x1x24xf32>
    %44 = vector.shape_cast %43 : vector<1x1x24xf32> to vector<24xf32>
    %45 = vector.shape_cast %44 : vector<24xf32> to vector<1x1x24xf32>
    %46 = vector.broadcast %45 : vector<1x1x24xf32> to vector<8x8x24xf32>
    %47 = arith.mulf %42, %46 : vector<8x8x24xf32>
    %48 = arith.addf %40, %47 : vector<8x8x24xf32>
    %c0_46 = arith.constant 0 : index
    %c0_47 = arith.constant 0 : index
    %c0_48 = arith.constant 0 : index
    %c1_49 = arith.constant 1 : index
    %c0_50 = arith.constant 0 : index
    %49 = vector.load %arg9[%c0_46, %c0_47, %c0_48, %c1_49, %c0_50] : memref<2x2x9x9x24xf32, #tpu.memory_space<vmem>>, vector<1x1x8x8x24xf32>
    %50 = vector.shape_cast %49 : vector<1x1x8x8x24xf32> to vector<8x8x24xf32>
    %51 = vector.extract_strided_slice %31 {offsets = [0, 2, 0], sizes = [1, 1, 24], strides = [1, 1, 1]} : vector<3x3x24xf32> to vector<1x1x24xf32>
    %52 = vector.shape_cast %51 : vector<1x1x24xf32> to vector<24xf32>
    %53 = vector.shape_cast %52 : vector<24xf32> to vector<1x1x24xf32>
    %54 = vector.broadcast %53 : vector<1x1x24xf32> to vector<8x8x24xf32>
    %55 = arith.mulf %50, %54 : vector<8x8x24xf32>
    %56 = arith.addf %48, %55 : vector<8x8x24xf32>
    %c1_51 = arith.constant 1 : index
    %c0_52 = arith.constant 0 : index
    %c0_53 = arith.constant 0 : index
    %c0_54 = arith.constant 0 : index
    %c0_55 = arith.constant 0 : index
    %57 = vector.load %arg9[%c1_51, %c0_52, %c0_53, %c0_54, %c0_55] : memref<2x2x9x9x24xf32, #tpu.memory_space<vmem>>, vector<1x1x8x8x24xf32>
    %58 = vector.shape_cast %57 : vector<1x1x8x8x24xf32> to vector<8x8x24xf32>
    %59 = vector.extract_strided_slice %31 {offsets = [1, 0, 0], sizes = [1, 1, 24], strides = [1, 1, 1]} : vector<3x3x24xf32> to vector<1x1x24xf32>
    %60 = vector.shape_cast %59 : vector<1x1x24xf32> to vector<24xf32>
    %61 = vector.shape_cast %60 : vector<24xf32> to vector<1x1x24xf32>
    %62 = vector.broadcast %61 : vector<1x1x24xf32> to vector<8x8x24xf32>
    %63 = arith.mulf %58, %62 : vector<8x8x24xf32>
    %64 = arith.addf %56, %63 : vector<8x8x24xf32>
    %c1_56 = arith.constant 1 : index
    %c1_57 = arith.constant 1 : index
    %c0_58 = arith.constant 0 : index
    %c0_59 = arith.constant 0 : index
    %c0_60 = arith.constant 0 : index
    %65 = vector.load %arg9[%c1_56, %c1_57, %c0_58, %c0_59, %c0_60] : memref<2x2x9x9x24xf32, #tpu.memory_space<vmem>>, vector<1x1x8x8x24xf32>
    %66 = vector.shape_cast %65 : vector<1x1x8x8x24xf32> to vector<8x8x24xf32>
    %67 = vector.extract_strided_slice %31 {offsets = [1, 1, 0], sizes = [1, 1, 24], strides = [1, 1, 1]} : vector<3x3x24xf32> to vector<1x1x24xf32>
    %68 = vector.shape_cast %67 : vector<1x1x24xf32> to vector<24xf32>
    %69 = vector.shape_cast %68 : vector<24xf32> to vector<1x1x24xf32>
    %70 = vector.broadcast %69 : vector<1x1x24xf32> to vector<8x8x24xf32>
    %71 = arith.mulf %66, %70 : vector<8x8x24xf32>
    %72 = arith.addf %64, %71 : vector<8x8x24xf32>
    %c1_61 = arith.constant 1 : index
    %c0_62 = arith.constant 0 : index
    %c0_63 = arith.constant 0 : index
    %c1_64 = arith.constant 1 : index
    %c0_65 = arith.constant 0 : index
    %73 = vector.load %arg9[%c1_61, %c0_62, %c0_63, %c1_64, %c0_65] : memref<2x2x9x9x24xf32, #tpu.memory_space<vmem>>, vector<1x1x8x8x24xf32>
    %74 = vector.shape_cast %73 : vector<1x1x8x8x24xf32> to vector<8x8x24xf32>
    %75 = vector.extract_strided_slice %31 {offsets = [1, 2, 0], sizes = [1, 1, 24], strides = [1, 1, 1]} : vector<3x3x24xf32> to vector<1x1x24xf32>
    %76 = vector.shape_cast %75 : vector<1x1x24xf32> to vector<24xf32>
    %77 = vector.shape_cast %76 : vector<24xf32> to vector<1x1x24xf32>
    %78 = vector.broadcast %77 : vector<1x1x24xf32> to vector<8x8x24xf32>
    %79 = arith.mulf %74, %78 : vector<8x8x24xf32>
    %80 = arith.addf %72, %79 : vector<8x8x24xf32>
    %c0_66 = arith.constant 0 : index
    %c0_67 = arith.constant 0 : index
    %c1_68 = arith.constant 1 : index
    %c0_69 = arith.constant 0 : index
    %c0_70 = arith.constant 0 : index
    %81 = vector.load %arg9[%c0_66, %c0_67, %c1_68, %c0_69, %c0_70] : memref<2x2x9x9x24xf32, #tpu.memory_space<vmem>>, vector<1x1x8x8x24xf32>
    %82 = vector.shape_cast %81 : vector<1x1x8x8x24xf32> to vector<8x8x24xf32>
    %83 = vector.extract_strided_slice %31 {offsets = [2, 0, 0], sizes = [1, 1, 24], strides = [1, 1, 1]} : vector<3x3x24xf32> to vector<1x1x24xf32>
    %84 = vector.shape_cast %83 : vector<1x1x24xf32> to vector<24xf32>
    %85 = vector.shape_cast %84 : vector<24xf32> to vector<1x1x24xf32>
    %86 = vector.broadcast %85 : vector<1x1x24xf32> to vector<8x8x24xf32>
    %87 = arith.mulf %82, %86 : vector<8x8x24xf32>
    %88 = arith.addf %80, %87 : vector<8x8x24xf32>
    %c0_71 = arith.constant 0 : index
    %c1_72 = arith.constant 1 : index
    %c1_73 = arith.constant 1 : index
    %c0_74 = arith.constant 0 : index
    %c0_75 = arith.constant 0 : index
    %89 = vector.load %arg9[%c0_71, %c1_72, %c1_73, %c0_74, %c0_75] : memref<2x2x9x9x24xf32, #tpu.memory_space<vmem>>, vector<1x1x8x8x24xf32>
    %90 = vector.shape_cast %89 : vector<1x1x8x8x24xf32> to vector<8x8x24xf32>
    %91 = vector.extract_strided_slice %31 {offsets = [2, 1, 0], sizes = [1, 1, 24], strides = [1, 1, 1]} : vector<3x3x24xf32> to vector<1x1x24xf32>
    %92 = vector.shape_cast %91 : vector<1x1x24xf32> to vector<24xf32>
    %93 = vector.shape_cast %92 : vector<24xf32> to vector<1x1x24xf32>
    %94 = vector.broadcast %93 : vector<1x1x24xf32> to vector<8x8x24xf32>
    %95 = arith.mulf %90, %94 : vector<8x8x24xf32>
    %96 = arith.addf %88, %95 : vector<8x8x24xf32>
    %c0_76 = arith.constant 0 : index
    %c0_77 = arith.constant 0 : index
    %c1_78 = arith.constant 1 : index
    %c1_79 = arith.constant 1 : index
    %c0_80 = arith.constant 0 : index
    %97 = vector.load %arg9[%c0_76, %c0_77, %c1_78, %c1_79, %c0_80] : memref<2x2x9x9x24xf32, #tpu.memory_space<vmem>>, vector<1x1x8x8x24xf32>
    %98 = vector.shape_cast %97 : vector<1x1x8x8x24xf32> to vector<8x8x24xf32>
    %99 = vector.extract_strided_slice %31 {offsets = [2, 2, 0], sizes = [1, 1, 24], strides = [1, 1, 1]} : vector<3x3x24xf32> to vector<1x1x24xf32>
    %100 = vector.shape_cast %99 : vector<1x1x24xf32> to vector<24xf32>
    %101 = vector.shape_cast %100 : vector<24xf32> to vector<1x1x24xf32>
    %102 = vector.broadcast %101 : vector<1x1x24xf32> to vector<8x8x24xf32>
    %103 = arith.mulf %98, %102 : vector<8x8x24xf32>
    %104 = arith.addf %96, %103 : vector<8x8x24xf32>
    %c0_81 = arith.constant 0 : index
    %c0_82 = arith.constant 0 : index
    %105 = vector.load %arg5[%c0_81, %c0_82] : memref<1x24xf32, #tpu.memory_space<vmem>>, vector<1x24xf32>
    %106 = vector.shape_cast %105 : vector<1x24xf32> to vector<1x1x24xf32>
    %107 = vector.broadcast %106 : vector<1x1x24xf32> to vector<8x8x24xf32>
    %108 = arith.addf %104, %107 : vector<8x8x24xf32>
    %cst_83 = arith.constant 0.000000e+00 : f32
    %109 = vector.broadcast %cst_83 : f32 to vector<8x8x24xf32>
    %110 = arith.maximumf %108, %109 : vector<8x8x24xf32>
    %111 = vector.shape_cast %110 : vector<8x8x24xf32> to vector<64x24xf32>
    %112 = arith.truncf %111 : vector<64x24xf32> to vector<64x24xbf16>
    %c0_84 = arith.constant 0 : index
    %c0_85 = arith.constant 0 : index
    %113 = vector.load %arg6[%c0_84, %c0_85] : memref<24x8xbf16, #tpu.memory_space<vmem>>, vector<24x8xbf16>
    %cst_86 = arith.constant dense<0.000000e+00> : vector<64x8xf32>
    %114 = tpu.matmul %112, %113, %cst_86 {dimension_numbers = #tpu.dot_dimension_numbers<[1], [0], [0], [1], [0, 0, 1, 1], [], []>} : vector<64x24xbf16>, vector<24x8xbf16>, vector<64x8xf32> -> vector<64x8xf32>
    %c0_87 = arith.constant 0 : index
    %c0_88 = arith.constant 0 : index
    %115 = vector.load %arg7[%c0_87, %c0_88] : memref<1x8xf32, #tpu.memory_space<vmem>>, vector<1x8xf32>
    %116 = vector.broadcast %115 : vector<1x8xf32> to vector<64x8xf32>
    %117 = arith.addf %114, %116 : vector<64x8xf32>
    %c0_89 = arith.constant 0 : index
    %c0_90 = arith.constant 0 : index
    %c0_91 = arith.constant 0 : index
    %118 = vector.load %arg8[%c0_89, %c0_90, %c0_91] : memref<1x64x8xf32, #tpu.memory_space<vmem>>, vector<1x64x8xf32>
    %119 = vector.shape_cast %118 : vector<1x64x8xf32> to vector<64x8xf32>
    %120 = vector.shape_cast %117 : vector<64x8xf32> to vector<1x64x8xf32>
    tpu.vector_store %arg8[%c0_89, %c0_90, %c0_91], %120 {strides = array<i32>} : memref<1x64x8xf32, #tpu.memory_space<vmem>>, vector<1x64x8xf32>,
    return
  }
  func.func @transform_0(%arg0: i32) -> (i32, i32, i32) {
    %c0_i32 = arith.constant 0 : i32
    %c0_i32_0 = arith.constant 0 : i32
    %c0_i32_1 = arith.constant 0 : i32
    return %arg0, %c0_i32, %c0_i32_0 : i32, i32, i32
  }
  func.func @transform_1(%arg0: i32) -> (i32, i32) {
    %c0_i32 = arith.constant 0 : i32
    %c0_i32_0 = arith.constant 0 : i32
    %c0_i32_1 = arith.constant 0 : i32
    return %c0_i32, %c0_i32_0 : i32, i32
  }
  func.func @transform_2(%arg0: i32) -> (i32, i32) {
    %c0_i32 = arith.constant 0 : i32
    %c0_i32_0 = arith.constant 0 : i32
    %c0_i32_1 = arith.constant 0 : i32
    return %c0_i32, %c0_i32_0 : i32, i32
  }
  func.func @transform_3(%arg0: i32) -> (i32, i32, i32) {
    %c0_i32 = arith.constant 0 : i32
    %c0_i32_0 = arith.constant 0 : i32
    %c0_i32_1 = arith.constant 0 : i32
    %c0_i32_2 = arith.constant 0 : i32
    return %c0_i32, %c0_i32_0, %c0_i32_1 : i32, i32, i32
  }
  func.func @transform_4(%arg0: i32) -> (i32, i32) {
    %c0_i32 = arith.constant 0 : i32
    %c0_i32_0 = arith.constant 0 : i32
    %c0_i32_1 = arith.constant 0 : i32
    return %c0_i32, %c0_i32_0 : i32, i32
  }
  func.func @transform_5(%arg0: i32) -> (i32, i32) {
    %c0_i32 = arith.constant 0 : i32
    %c0_i32_0 = arith.constant 0 : i32
    %c0_i32_1 = arith.constant 0 : i32
    return %c0_i32, %c0_i32_0 : i32, i32
  }
  func.func @transform_6(%arg0: i32) -> (i32, i32) {
    %c0_i32 = arith.constant 0 : i32
    %c0_i32_0 = arith.constant 0 : i32
    %c0_i32_1 = arith.constant 0 : i32
    return %c0_i32, %c0_i32_0 : i32, i32
  }
  func.func @transform_7(%arg0: i32) -> (i32, i32, i32) {
    %c0_i32 = arith.constant 0 : i32
    %c0_i32_0 = arith.constant 0 : i32
    %c0_i32_1 = arith.constant 0 : i32
    return %arg0, %c0_i32, %c0_i32_0 : i32, i32, i32
  }
}

</mosaic_0001>

<llo_original>
// kernel: linear_bottleneck.1
$region0: #{linear_bottleneck.1}
  #allocation0 [shape = 'u32[]', space=smem, size = 0x4, offset = 0x4, fixed_abs, tag = 'smem constant byte address 0x4 - core index']
  #allocation1 [shape = 'u32[144,128]{1,0:T(1,128)}', space=vmem, size = 0x12000, scoped, tag = 'internal scratch']
  #allocation2 [shape = 'f32[2,2,9,9,24]{4,3,2,1,0:T(8,128)}', space=vmem, size = 0x48000, scoped, tag = 'scratch operand']
  %s0 = inlined_call_operand.vmem [shape: bf16[2,256,4], index: 0, kind: input, shape index: {}]
  %s1 = inlined_call_operand.vmem [shape: bf16[4,24], index: 1, kind: input, shape index: {}]
  %s2 = inlined_call_operand.vmem [shape: f32[1,24], index: 2, kind: input, shape index: {}]
  %s3 = inlined_call_operand.vmem [shape: f32[3,3,24], index: 3, kind: input, shape index: {}]
  %s4 = inlined_call_operand.vmem [shape: f32[1,24], index: 4, kind: input, shape index: {}]
  %s5 = inlined_call_operand.vmem [shape: bf16[24,8], index: 5, kind: input, shape index: {}]
  %s6 = inlined_call_operand.vmem [shape: f32[1,8], index: 6, kind: input, shape index: {}]
  %s7 = inlined_call_operand.vmem [shape: f32[2,64,8], index: 7, kind: output, shape index: {}]
  %s8 = sld [smem:[#allocation0]]
  $region61: #{linear_bottleneck.1} parent=0
    _
  %s10 = ssub.s32 1, %s8
  %s11 = scalar_select 0, %s10, %s8
  loop: start=0, step=1, limit=4
  $region2: #{linear_bottleneck.1} parent=0 // loop_pre_header
    _
  $region3: #{linear_bottleneck.1} parent=0 // loop_header
    %s13 = sphi 0, %s17
    %p14 = scmp.ge.s32.totalorder %s13, 4
    %s23 = sphi 0, %s25
    %s26 = sphi 0, %s23
    %s27 = sphi 0, %s26
    %s43 = sphi 0, %s27
    %s47 = sphi 0, %s47
    %s49 = sphi 0, %s47
    %s50 = sphi 0, %s49
    %s64 = sphi 0, %s50
    %s68 = sphi 0, %s68
    %s70 = sphi 0, %s68
    %s71 = sphi 0, %s70
    %s85 = sphi 0, %s71
    %s89 = sphi 0, %s89
    %s91 = sphi 0, %s89
    %s92 = sphi 0, %s91
    %s106 = sphi 0, %s92
    %s110 = sphi 0, %s110
    %s112 = sphi 0, %s110
    %s113 = sphi 0, %s112
    %s127 = sphi 0, %s113
    %s131 = sphi 0, %s131
    %s133 = sphi 0, %s131
    %s134 = sphi 0, %s133
    %s148 = sphi 0, %s134
    %s152 = sphi 0, %s152
    %s154 = sphi 0, %s152
    %s155 = sphi 0, %s154
    %s169 = sphi 0, %s155
    %s175 = sphi 0, %s177
    %s178 = sphi 0, %s175
    %s179 = sphi 0, %s178
    %s195 = sphi 0, %s179
  $region4: #{linear_bottleneck.1} parent=0 // loop_header_branch
    %16 = sbr.rel (%p14) target = $region8
  $region5: #{linear_bottleneck.1} parent=0 // loop_body
    %s18 = ssub.s32 %s13, 1
    %s19 = ssub.s32 %s13, 2
    %s20 = sadd.s32 %s13, 1
    %s21 = ssub.s32 %s13, %s20
    %p22 = scmp.eq.s32.totalorder %s21, 0
    %s24 = sadd.s32 %s23, 1
    %s25 = scalar_select %p22, %s23, %s24
    %p28 = pneg %p22
    %p29 = scmp.eq.s32.totalorder %s13, 1
    %p30 = por %p28, %p29
    %p31 = scmp.ne.s32.totalorder %s23, %s26
    %p32 = scmp.eq.s32.totalorder %s13, 0
    %p33 = por %p31, %p32
    %p34 = scmp.ne.s32.totalorder %s23, %s26
    %p35 = scmp.eq.s32.totalorder %s18, 1
    %p36 = por %p34, %p35
    %p37 = scmp.ne.s32.totalorder %s26, %s27
    %p38 = scmp.eq.s32.totalorder %s18, 0
    %p39 = por %p37, %p38
    %p40 = scmp.ne.s32.totalorder %s26, %s27
    %p41 = scmp.eq.s32.totalorder %s19, 1
    %p42 = por %p40, %p41
    %p44 = scmp.ne.s32.totalorder %s27, %s43
    %p45 = scmp.eq.s32.totalorder %s19, 0
    %p46 = por %p44, %p45
    %s48 = sadd.s32 %s47, 1
    %p51 = scmp.eq.s32.totalorder %s13, 1
    %p52 = scmp.ne.s32.totalorder %s47, %s49
    %p53 = scmp.eq.s32.totalorder %s13, 0
    %p54 = por %p52, %p53
    %p55 = scmp.ne.s32.totalorder %s47, %s49
    %p56 = scmp.eq.s32.totalorder %s18, 1
    %p57 = por %p55, %p56
    %p58 = scmp.ne.s32.totalorder %s49, %s50
    %p59 = scmp.eq.s32.totalorder %s18, 0
    %p60 = por %p58, %p59
    %p61 = scmp.ne.s32.totalorder %s49, %s50
    %p62 = scmp.eq.s32.totalorder %s19, 1
    %p63 = por %p61, %p62
    %p65 = scmp.ne.s32.totalorder %s50, %s64
    %p66 = scmp.eq.s32.totalorder %s19, 0
    %p67 = por %p65, %p66
    %s69 = sadd.s32 %s68, 1
    %p72 = scmp.eq.s32.totalorder %s13, 1
    %p73 = scmp.ne.s32.totalorder %s68, %s70
    %p74 = scmp.eq.s32.totalorder %s13, 0
    %p75 = por %p73, %p74
    %p76 = scmp.ne.s32.totalorder %s68, %s70
    %p77 = scmp.eq.s32.totalorder %s18, 1
    %p78 = por %p76, %p77
    %p79 = scmp.ne.s32.totalorder %s70, %s71
    %p80 = scmp.eq.s32.totalorder %s18, 0
    %p81 = por %p79, %p80
    %p82 = scmp.ne.s32.totalorder %s70, %s71
    %p83 = scmp.eq.s32.totalorder %s19, 1
    %p84 = por %p82, %p83
    %p86 = scmp.ne.s32.totalorder %s71, %s85
    %p87 = scmp.eq.s32.totalorder %s19, 0
    %p88 = por %p86, %p87
    %s90 = sadd.s32 %s89, 1
    %p93 = scmp.eq.s32.totalorder %s13, 1
    %p94 = scmp.ne.s32.totalorder %s89, %s91
    %p95 = scmp.eq.s32.totalorder %s13, 0
    %p96 = por %p94, %p95
    %p97 = scmp.ne.s32.totalorder %s89, %s91
    %p98 = scmp.eq.s32.totalorder %s18, 1
    %p99 = por %p97, %p98
    %p100 = scmp.ne.s32.totalorder %s91, %s92
    %p101 = scmp.eq.s32.totalorder %s18, 0
    %p102 = por %p100, %p101
    %p103 = scmp.ne.s32.totalorder %s91, %s92
    %p104 = scmp.eq.s32.totalorder %s19, 1
    %p105 = por %p103, %p104
    %p107 = scmp.ne.s32.totalorder %s92, %s106
    %p108 = scmp.eq.s32.totalorder %s19, 0
    %p109 = por %p107, %p108
    %s111 = sadd.s32 %s110, 1
    %p114 = scmp.eq.s32.totalorder %s13, 1
    %p115 = scmp.ne.s32.totalorder %s110, %s112
    %p116 = scmp.eq.s32.totalorder %s13, 0
    %p117 = por %p115, %p116
    %p118 = scmp.ne.s32.totalorder %s110, %s112
    %p119 = scmp.eq.s32.totalorder %s18, 1
    %p120 = por %p118, %p119
    %p121 = scmp.ne.s32.totalorder %s112, %s113
    %p122 = scmp.eq.s32.totalorder %s18, 0
    %p123 = por %p121, %p122
    %p124 = scmp.ne.s32.totalorder %s112, %s113
    %p125 = scmp.eq.s32.totalorder %s19, 1
    %p126 = por %p124, %p125
    %p128 = scmp.ne.s32.totalorder %s113, %s127
    %p129 = scmp.eq.s32.totalorder %s19, 0
    %p130 = por %p128, %p129
    %s132 = sadd.s32 %s131, 1
    %p135 = scmp.eq.s32.totalorder %s13, 1
    %p136 = scmp.ne.s32.totalorder %s131, %s133
    %p137 = scmp.eq.s32.totalorder %s13, 0
    %p138 = por %p136, %p137
    %p139 = scmp.ne.s32.totalorder %s131, %s133
    %p140 = scmp.eq.s32.totalorder %s18, 1
    %p141 = por %p139, %p140
    %p142 = scmp.ne.s32.totalorder %s133, %s134
    %p143 = scmp.eq.s32.totalorder %s18, 0
    %p144 = por %p142, %p143
    %p145 = scmp.ne.s32.totalorder %s133, %s134
    %p146 = scmp.eq.s32.totalorder %s19, 1
    %p147 = por %p145, %p146
    %p149 = scmp.ne.s32.totalorder %s134, %s148
    %p150 = scmp.eq.s32.totalorder %s19, 0
    %p151 = por %p149, %p150
    %s153 = sadd.s32 %s152, 1
    %p156 = scmp.eq.s32.totalorder %s13, 1
    %p157 = scmp.ne.s32.totalorder %s152, %s154
    %p158 = scmp.eq.s32.totalorder %s13, 0
    %p159 = por %p157, %p158
    %p160 = scmp.ne.s32.totalorder %s152, %s154
    %p161 = scmp.eq.s32.totalorder %s18, 1
    %p162 = por %p160, %p161
    %p163 = scmp.ne.s32.totalorder %s154, %s155
    %p164 = scmp.eq.s32.totalorder %s18, 0
    %p165 = por %p163, %p164
    %p166 = scmp.ne.s32.totalorder %s154, %s155
    %p167 = scmp.eq.s32.totalorder %s19, 1
    %p168 = por %p166, %p167
    %p170 = scmp.ne.s32.totalorder %s155, %s169
    %p171 = scmp.eq.s32.totalorder %s19, 0
    %p172 = por %p170, %p171
    %s173 = ssub.s32 %s13, %s20
    %p174 = scmp.eq.s32.totalorder %s173, 0
    %s176 = sadd.s32 %s175, 1
    %s177 = scalar_select %p174, %s175, %s176
    %p180 = pneg %p174
    %p181 = scmp.eq.s32.totalorder %s13, 1
    %p182 = por %p180, %p181
    %p183 = scmp.ne.s32.totalorder %s175, %s178
    %p184 = scmp.eq.s32.totalorder %s13, 0
    %p185 = por %p183, %p184
    %p186 = scmp.ne.s32.totalorder %s175, %s178
    %p187 = scmp.eq.s32.totalorder %s18, 1
    %p188 = por %p186, %p187
    %p189 = scmp.ne.s32.totalorder %s178, %s179
    %p190 = scmp.eq.s32.totalorder %s18, 0
    %p191 = por %p189, %p190
    %p192 = scmp.ne.s32.totalorder %s178, %s179
    %p193 = scmp.eq.s32.totalorder %s19, 1
    %p194 = por %p192, %p193
    %p196 = scmp.ne.s32.totalorder %s179, %s195
    %p197 = scmp.eq.s32.totalorder %s19, 0
    %p198 = por %p196, %p197
    %p199 = scmp.le.s32.totalorder 1, %s13
    %p200 = scmp.lt.s32.totalorder %s13, 3
    %p201 = pnand %p199, %p200
    %p202 = pneg %p201
    // Predicated region
    $region9: #{linear_bottleneck.1} parent=5 // pred_check
      _
    $region10: #{linear_bottleneck.1} parent=5 // pred_check_branch
      %204 = sbr.rel (%p201) target = $region12
    $region11: #{linear_bottleneck.1} parent=5 // pred_region
      %s205 = ssub.s32 %s13, 1
      // Predicated region
      $region13: #{linear_bottleneck.1} parent=11 // pred_check
        %p206 = pneg %p60
      $region14: #{linear_bottleneck.1} parent=11 // pred_check_branch
        %208 = sbr.rel (%p206) target = $region16
      $region15: #{linear_bottleneck.1} parent=11 // pred_region
        _
      $region16: #{linear_bottleneck.1} parent=11 // pred_fallthru
        _
      // Predicated region
      $region17: #{linear_bottleneck.1} parent=11 // pred_check
        %p209 = pneg %p81
      $region18: #{linear_bottleneck.1} parent=11 // pred_check_branch
        %211 = sbr.rel (%p209) target = $region20
      $region19: #{linear_bottleneck.1} parent=11 // pred_region
        _
      $region20: #{linear_bottleneck.1} parent=11 // pred_fallthru
        _
      // Predicated region
      $region21: #{linear_bottleneck.1} parent=11 // pred_check
        %p212 = pneg %p102
      $region22: #{linear_bottleneck.1} parent=11 // pred_check_branch
        %214 = sbr.rel (%p212) target = $region24
      $region23: #{linear_bottleneck.1} parent=11 // pred_region
        _
      $region24: #{linear_bottleneck.1} parent=11 // pred_fallthru
        _
      // Predicated region
      $region25: #{linear_bottleneck.1} parent=11 // pred_check
        %p215 = pneg %p123
      $region26: #{linear_bottleneck.1} parent=11 // pred_check_branch
        %217 = sbr.rel (%p215) target = $region28
      $region27: #{linear_bottleneck.1} parent=11 // pred_region
        _
      $region28: #{linear_bottleneck.1} parent=11 // pred_fallthru
        _
      // Predicated region
      $region29: #{linear_bottleneck.1} parent=11 // pred_check
        %p218 = pneg %p144
      $region30: #{linear_bottleneck.1} parent=11 // pred_check_branch
        %220 = sbr.rel (%p218) target = $region32
      $region31: #{linear_bottleneck.1} parent=11 // pred_region
        _
      $region32: #{linear_bottleneck.1} parent=11 // pred_fallthru
        _
      // Predicated region
      $region33: #{linear_bottleneck.1} parent=11 // pred_check
        %p221 = pneg %p165
      $region34: #{linear_bottleneck.1} parent=11 // pred_check_branch
        %223 = sbr.rel (%p221) target = $region36
      $region35: #{linear_bottleneck.1} parent=11 // pred_region
        _
      $region36: #{linear_bottleneck.1} parent=11 // pred_fallthru
        _
    $region12: #{linear_bottleneck.1} parent=5 // pred_fallthru
      _
    %p224 = scmp.lt.s32.totalorder %s13, 2
    // Predicated region
    $region37: #{linear_bottleneck.1} parent=5 // pred_check
      %p225 = pneg %p224
    $region38: #{linear_bottleneck.1} parent=5 // pred_check_branch
      %227 = sbr.rel (%p225) target = $region40
    $region39: #{linear_bottleneck.1} parent=5 // pred_region
      // Predicated region
      $region41: #{linear_bottleneck.1} parent=39 // pred_check
        %p228 = pneg %p33
      $region42: #{linear_bottleneck.1} parent=39 // pred_check_branch
        %230 = sbr.rel (%p228) target = $region44
      $region43: #{linear_bottleneck.1} parent=39 // pred_region
        %p231 = scmp.lt.s32.totalorder %s13, 1
        %s232 = scalar_select %p231, %s13, 1
        %s233 = smul.addr %s232, 32
        %s234 = smul.addr %s233, 4
        %s235 = scalar_lea.vmem %s0, %s234
      $region44: #{linear_bottleneck.1} parent=39 // pred_fallthru
        _
    $region40: #{linear_bottleneck.1} parent=5 // pred_fallthru
      _
    %p236 = scmp.le.s32.totalorder 1, %s13
    %p237 = scmp.lt.s32.totalorder %s13, 3
    %p238 = pnand %p236, %p237
    %p239 = pneg %p238
    // Predicated region
    $region45: #{linear_bottleneck.1} parent=5 // pred_check
      _
    $region46: #{linear_bottleneck.1} parent=5 // pred_check_branch
      %241 = sbr.rel (%p238) target = $region48
    $region47: #{linear_bottleneck.1} parent=5 // pred_region
      %s242 = ssub.s32 %s13, 1
      %p243 = scmp.lt.s32.totalorder %s18, 1
      %s244 = scalar_select %p243, %s18, 1
      %s245 = smul.addr %s244, 32
      %s246 = smul.addr %s245, 4
      %s247 = scalar_lea.vmem %s0, %s246
      %p248 = pneg %p39
      %p249 = pneg %p36
      %p250 = pneg %p60
      %p251 = pneg %p57
      %p252 = pneg %p81
      %p253 = pneg %p78
      %p254 = pneg %p102
      %p255 = pneg %p99
      %p256 = pneg %p123
      %p257 = pneg %p120
      %p258 = pneg %p144
      %p259 = pneg %p141
      %p260 = pneg %p165
      %p261 = pneg %p162
      %p262 = pneg %p191
      %p263 = pneg %p188
      %p264 = scmp.lt.s32.totalorder %s18, 1
      %s265 = scalar_select %p264, %s18, 1
      %s266 = smul.addr %s265, 8
      %s267 = smul.addr %s266, 8
      %s268 = scalar_lea.vmem %s7, %s267
      %p269 = scmp.lt.s32.totalorder %s18, 1
      %s270 = scalar_select %p269, %s18, 1
      %s271 = smul.addr %s270, 32
      %s272 = smul.addr %s271, 4
      %s273 = scalar_lea.vmem %s0, %s272
      %p274 = scmp.lt.s32.totalorder %s18, 1
      %s275 = scalar_select %p274, %s18, 1
      %s276 = smul.addr %s275, 8
      %s277 = smul.addr %s276, 8
      %s278 = scalar_lea.vmem %s7, %s277
      %v280 = vld [vmem:[%s273] sm:$0xf]
      %v281 = vld [vmem:[%s273 + $0x4] sm:$0xf]
      %v282 = vld [vmem:[%s273 + $0x8] sm:$0xf]
      %v283 = vld [vmem:[%s273 + $0xc] sm:$0xf]
      %v284 = vld [vmem:[%s273 + $0x10] sm:$0xf]
      %v285 = vld [vmem:[%s273 + $0x14] sm:$0xf]
      %v286 = vld [vmem:[%s273 + $0x18] sm:$0xf]
      %v287 = vld [vmem:[%s273 + $0x1c] sm:$0xf]
      %v288 = vld [vmem:[%s273 + $0x20] sm:$0xf]
      %v289 = vld [vmem:[%s273 + $0x24] sm:$0xf]
      %v290 = vld [vmem:[%s273 + $0x28] sm:$0xf]
      %v291 = vld [vmem:[%s273 + $0x2c] sm:$0xf]
      %v292 = vld [vmem:[%s273 + $0x30] sm:$0xf]
      %v293 = vld [vmem:[%s273 + $0x34] sm:$0xf]
      %v294 = vld [vmem:[%s273 + $0x38] sm:$0xf]
      %v295 = vld [vmem:[%s273 + $0x3c] sm:$0xf]
      %v296 = vld [vmem:[%s273 + $0x40] sm:$0xf]
      %v297 = vld [vmem:[%s273 + $0x44] sm:$0xf]
      %v298 = vld [vmem:[%s273 + $0x48] sm:$0xf]
      %v299 = vld [vmem:[%s273 + $0x4c] sm:$0xf]
      %v300 = vld [vmem:[%s273 + $0x50] sm:$0xf]
      %v301 = vld [vmem:[%s273 + $0x54] sm:$0xf]
      %v302 = vld [vmem:[%s273 + $0x58] sm:$0xf]
      %v303 = vld [vmem:[%s273 + $0x5c] sm:$0xf]
      %v304 = vld [vmem:[%s273 + $0x60] sm:$0xf]
      %v305 = vld [vmem:[%s273 + $0x64] sm:$0xf]
      %v306 = vld [vmem:[%s273 + $0x68] sm:$0xf]
      %v307 = vld [vmem:[%s273 + $0x6c] sm:$0xf]
      %v308 = vld [vmem:[%s273 + $0x70] sm:$0xf]
      %v309 = vld [vmem:[%s273 + $0x74] sm:$0xf]
      %v310 = vld [vmem:[%s273 + $0x78] sm:$0xf]
      %v311 = vld [vmem:[%s273 + $0x7c] sm:$0xf]
      %v312 = vld [vmem:[%s1] sm:$0x3]
      %v313 = vld [vmem:[%s2] sm:$0x1]
      %v315 = vlaneseq
      %v316 = vshrl.u32 %v315, 7
      %v317 = vsub.s32 0, %v316
      %v318 = vrot.slane %v313, %v317
      %v352 = vunpack.c.l.b16 %v280
      %v353 = vunpack.c.l.b16 %v281
      %v354 = vunpack.c.l.b16 %v282
      %v355 = vunpack.c.l.b16 %v283
      %v356 = vunpack.c.l.b16 %v284
      %v357 = vunpack.c.l.b16 %v285
      %v358 = vunpack.c.l.b16 %v286
      %v359 = vunpack.c.l.b16 %v287
      %v360 = vunpack.c.l.b16 %v288
      %v361 = vunpack.c.l.b16 %v289
      %v362 = vunpack.c.l.b16 %v290
      %v363 = vunpack.c.l.b16 %v291
      %v364 = vunpack.c.l.b16 %v292
      %v365 = vunpack.c.l.b16 %v293
      %v366 = vunpack.c.l.b16 %v294
      %v367 = vunpack.c.l.b16 %v295
      %v368 = vunpack.c.l.b16 %v296
      %v369 = vunpack.c.l.b16 %v297
      %v370 = vunpack.c.l.b16 %v298
      %v371 = vunpack.c.l.b16 %v299
      %v372 = vunpack.c.l.b16 %v300
      %v373 = vunpack.c.l.b16 %v301
      %v374 = vunpack.c.l.b16 %v302
      %v375 = vunpack.c.l.b16 %v303
      %v376 = vunpack.c.l.b16 %v304
      %v377 = vunpack.c.l.b16 %v305
      %v378 = vunpack.c.l.b16 %v306
      %v379 = vunpack.c.l.b16 %v307
      %v380 = vunpack.c.l.b16 %v308
      %v381 = vunpack.c.l.b16 %v309
      %v382 = vunpack.c.l.b16 %v310
      %v383 = vunpack.c.l.b16 %v311
      %v384 = vpack.c.b16 %v353, %v352
      %v385 = vpack.c.b16 %v355, %v354
      %v386 = vpack.c.b16 %v357, %v356
      %v387 = vpack.c.b16 %v359, %v358
      %v388 = vpack.c.b16 %v361, %v360
      %v389 = vpack.c.b16 %v363, %v362
      %v390 = vpack.c.b16 %v365, %v364
      %v391 = vpack.c.b16 %v367, %v366
      %v392 = vpack.c.b16 %v369, %v368
      %v393 = vpack.c.b16 %v371, %v370
      %v394 = vpack.c.b16 %v373, %v372
      %v395 = vpack.c.b16 %v375, %v374
      %v396 = vpack.c.b16 %v377, %v376
      %v397 = vpack.c.b16 %v379, %v378
      %v398 = vpack.c.b16 %v381, %v380
      %v399 = vpack.c.b16 %v383, %v382
      %vm400 = vcmask 31744
      %v402 = vsel %vm400, %v384, 0
      %v405 = vsel %vm400, %v385, 0
      %v408 = vsel %vm400, %v386, 0
      %v411 = vsel %vm400, %v387, 0
      %v414 = vsel %vm400, %v388, 0
      %v417 = vsel %vm400, %v389, 0
      %v420 = vsel %vm400, %v390, 0
      %v423 = vsel %vm400, %v391, 0
      %v426 = vsel %vm400, %v392, 0
      %v429 = vsel %vm400, %v393, 0
      %v432 = vsel %vm400, %v394, 0
      %v435 = vsel %vm400, %v395, 0
      %v438 = vsel %vm400, %v396, 0
      %v441 = vsel %vm400, %v397, 0
      %v444 = vsel %vm400, %v398, 0
      %v447 = vsel %vm400, %v399, 0
      %vm449 = vcmask 1041408
      %v451 = vsel %vm449, %v312, 0
      %453 = vmatprep.subr.bf16.mxu0 0
      %454 = vmatpush1.bf16.msra.mxu0 %v451
      %455 = vmatprep.subr.bf16.mxu0 0
      %456 = vmatpush1.bf16.msra.mxu0 0
      %457 = vmatprep.subr.bf16.mxu0 0
      %458 = vmatpush1.bf16.msra.mxu0 0
      %459 = vmatprep.subr.bf16.mxu0 0
      %460 = vmatpush1.bf16.msra.mxu0 0
      %461 = vmatprep.subr.bf16.mxu0 0
      %462 = vmatpush1.bf16.msra.mxu0 0
      %463 = vmatprep.subr.bf16.mxu0 0
      %464 = vmatpush1.bf16.msra.mxu0 0
      %465 = vmatprep.subr.bf16.mxu0 0
      %466 = vmatpush1.bf16.msra.mxu0 0
      %467 = vmatprep.subr.bf16.mxu0 0
      %468 = vmatpush1.bf16.msra.mxu0 0
      %469 = vmatprep.subr.bf16.mxu0 0
      %470 = vmatpush1.bf16.msra.mxu0 0
      %471 = vmatprep.subr.bf16.mxu0 0
      %472 = vmatpush1.bf16.msra.mxu0 0
      %473 = vmatprep.subr.bf16.mxu0 0
      %474 = vmatpush1.bf16.msra.mxu0 0
      %475 = vmatprep.subr.bf16.mxu0 0
      %476 = vmatpush1.bf16.msra.mxu0 0
      %477 = vmatprep.subr.bf16.mxu0 0
      %478 = vmatpush1.bf16.msra.mxu0 0
      %479 = vmatprep.subr.bf16.mxu0 0
      %480 = vmatpush1.bf16.msra.mxu0 0
      %481 = vmatprep.subr.bf16.mxu0 0
      %482 = vmatpush1.bf16.msra.mxu0 0
      %483 = vmatprep.subr.bf16.mxu0 0
      %484 = vmatpush1.bf16.msra.mxu0 0
      %485 = vmatprep.mubr.bf16.mxu0 0
      %486 = vmatmul.mubr.bf16.gmra.mrb[0].mxu0 %v402
      %v487 = vpop.f32.mrb[0].mxu0
      %v488 = vadd.f32 %v318, %v487
      %v489 = vpop.f32.mrb[0].mxu0
      %v490 = vpop.f32.mrb[0].mxu0
      %v491 = vadd.f32 %v318, %v490
      %v492 = vpop.f32.mrb[0].mxu0
      %493 = vmatprep.mubr.bf16.mxu0 0
      %494 = vmatmul.mubr.bf16.gmra.mrb[0].mxu0 %v405
      %v495 = vpop.f32.mrb[0].mxu0
      %v496 = vadd.f32 %v318, %v495
      %v497 = vpop.f32.mrb[0].mxu0
      %v498 = vpop.f32.mrb[0].mxu0
      %v499 = vadd.f32 %v318, %v498
      %v500 = vpop.f32.mrb[0].mxu0
      %501 = vmatprep.mubr.bf16.mxu0 0
      %502 = vmatmul.mubr.bf16.gmra.mrb[0].mxu0 %v408
      %v503 = vpop.f32.mrb[0].mxu0
      %v504 = vadd.f32 %v318, %v503
      %v505 = vpop.f32.mrb[0].mxu0
      %v506 = vpop.f32.mrb[0].mxu0
      %v507 = vadd.f32 %v318, %v506
      %v508 = vpop.f32.mrb[0].mxu0
      %509 = vmatprep.mubr.bf16.mxu0 0
      %510 = vmatmul.mubr.bf16.gmra.mrb[0].mxu0 %v411
      %v511 = vpop.f32.mrb[0].mxu0
      %v512 = vadd.f32 %v318, %v511
      %v513 = vpop.f32.mrb[0].mxu0
      %v514 = vpop.f32.mrb[0].mxu0
      %v515 = vadd.f32 %v318, %v514
      %v516 = vpop.f32.mrb[0].mxu0
      %517 = vmatprep.mubr.bf16.mxu0 0
      %518 = vmatmul.mubr.bf16.gmra.mrb[0].mxu0 %v414
      %v519 = vpop.f32.mrb[0].mxu0
      %v520 = vadd.f32 %v318, %v519
      %v521 = vpop.f32.mrb[0].mxu0
      %v522 = vpop.f32.mrb[0].mxu0
      %v523 = vadd.f32 %v318, %v522
      %v524 = vpop.f32.mrb[0].mxu0
      %525 = vmatprep.mubr.bf16.mxu0 0
      %526 = vmatmul.mubr.bf16.gmra.mrb[0].mxu0 %v417
      %v527 = vpop.f32.mrb[0].mxu0
      %v528 = vadd.f32 %v318, %v527
      %v529 = vpop.f32.mrb[0].mxu0
      %v530 = vpop.f32.mrb[0].mxu0
      %v531 = vadd.f32 %v318, %v530
      %v532 = vpop.f32.mrb[0].mxu0
      %533 = vmatprep.mubr.bf16.mxu0 0
      %534 = vmatmul.mubr.bf16.gmra.mrb[0].mxu0 %v420
      %v535 = vpop.f32.mrb[0].mxu0
      %v536 = vadd.f32 %v318, %v535
      %v537 = vpop.f32.mrb[0].mxu0
      %v538 = vpop.f32.mrb[0].mxu0
      %v539 = vadd.f32 %v318, %v538
      %v540 = vpop.f32.mrb[0].mxu0
      %541 = vmatprep.mubr.bf16.mxu0 0
      %542 = vmatmul.mubr.bf16.gmra.mrb[0].mxu0 %v423
      %v543 = vpop.f32.mrb[0].mxu0
      %v544 = vadd.f32 %v318, %v543
      %v545 = vpop.f32.mrb[0].mxu0
      %v546 = vpop.f32.mrb[0].mxu0
      %v547 = vadd.f32 %v318, %v546
      %v548 = vpop.f32.mrb[0].mxu0
      %549 = vmatprep.mubr.bf16.mxu0 0
      %550 = vmatmul.mubr.bf16.gmra.mrb[0].mxu0 %v426
      %v551 = vpop.f32.mrb[0].mxu0
      %v552 = vadd.f32 %v318, %v551
      %v553 = vpop.f32.mrb[0].mxu0
      %v554 = vpop.f32.mrb[0].mxu0
      %v555 = vadd.f32 %v318, %v554
      %v556 = vpop.f32.mrb[0].mxu0
      %557 = vmatprep.mubr.bf16.mxu0 0
      %558 = vmatmul.mubr.bf16.gmra.mrb[0].mxu0 %v429
      %v559 = vpop.f32.mrb[0].mxu0
      %v560 = vadd.f32 %v318, %v559
      %v561 = vpop.f32.mrb[0].mxu0
      %v562 = vpop.f32.mrb[0].mxu0
      %v563 = vadd.f32 %v318, %v562
      %v564 = vpop.f32.mrb[0].mxu0
      %565 = vmatprep.mubr.bf16.mxu0 0
      %566 = vmatmul.mubr.bf16.gmra.mrb[0].mxu0 %v432
      %v567 = vpop.f32.mrb[0].mxu0
      %v568 = vadd.f32 %v318, %v567
      %v569 = vpop.f32.mrb[0].mxu0
      %v570 = vpop.f32.mrb[0].mxu0
      %v571 = vadd.f32 %v318, %v570
      %v572 = vpop.f32.mrb[0].mxu0
      %573 = vmatprep.mubr.bf16.mxu0 0
      %574 = vmatmul.mubr.bf16.gmra.mrb[0].mxu0 %v435
      %v575 = vpop.f32.mrb[0].mxu0
      %v576 = vadd.f32 %v318, %v575
      %v577 = vpop.f32.mrb[0].mxu0
      %v578 = vpop.f32.mrb[0].mxu0
      %v579 = vadd.f32 %v318, %v578
      %v580 = vpop.f32.mrb[0].mxu0
      %581 = vmatprep.mubr.bf16.mxu0 0
      %582 = vmatmul.mubr.bf16.gmra.mrb[0].mxu0 %v438
      %v583 = vpop.f32.mrb[0].mxu0
      %v584 = vadd.f32 %v318, %v583
      %v585 = vpop.f32.mrb[0].mxu0
      %v586 = vpop.f32.mrb[0].mxu0
      %v587 = vadd.f32 %v318, %v586
      %v588 = vpop.f32.mrb[0].mxu0
      %589 = vmatprep.mubr.bf16.mxu0 0
      %590 = vmatmul.mubr.bf16.gmra.mrb[0].mxu0 %v441
      %v591 = vpop.f32.mrb[0].mxu0
      %v592 = vadd.f32 %v318, %v591
      %v593 = vpop.f32.mrb[0].mxu0
      %v594 = vpop.f32.mrb[0].mxu0
      %v595 = vadd.f32 %v318, %v594
      %v596 = vpop.f32.mrb[0].mxu0
      %597 = vmatprep.mubr.bf16.mxu0 0
      %598 = vmatmul.mubr.bf16.gmra.mrb[0].mxu0 %v444
      %v599 = vpop.f32.mrb[0].mxu0
      %v600 = vadd.f32 %v318, %v599
      %v601 = vpop.f32.mrb[0].mxu0
      %v602 = vpop.f32.mrb[0].mxu0
      %v603 = vadd.f32 %v318, %v602
      %v604 = vpop.f32.mrb[0].mxu0
      %605 = vmatprep.mubr.bf16.mxu0 0
      %606 = vmatmul.mubr.bf16.gmra.mrb[0].mxu0 %v447
      %v607 = vpop.f32.mrb[0].mxu0
      %v608 = vadd.f32 %v318, %v607
      %v609 = vpop.f32.mrb[0].mxu0
      %v610 = vpop.f32.mrb[0].mxu0
      %v611 = vadd.f32 %v318, %v610
      %v612 = vpop.f32.mrb[0].mxu0
      %613 = vdwg.mxu0
      %v614 = vmax.f32 %v488, 0.0
      %v615 = vmax.f32 %v491, 0.0
      %v616 = vmax.f32 %v496, 0.0
      %v617 = vmax.f32 %v499, 0.0
      %v618 = vmax.f32 %v504, 0.0
      %v619 = vmax.f32 %v507, 0.0
      %v620 = vmax.f32 %v512, 0.0
      %v621 = vmax.f32 %v515, 0.0
      %v622 = vmax.f32 %v520, 0.0
      %v623 = vmax.f32 %v523, 0.0
      %v624 = vmax.f32 %v528, 0.0
      %v625 = vmax.f32 %v531, 0.0
      %v626 = vmax.f32 %v536, 0.0
      %v627 = vmax.f32 %v539, 0.0
      %v628 = vmax.f32 %v544, 0.0
      %v629 = vmax.f32 %v547, 0.0
      %v630 = vmax.f32 %v552, 0.0
      %v631 = vmax.f32 %v555, 0.0
      %v632 = vmax.f32 %v560, 0.0
      %v633 = vmax.f32 %v563, 0.0
      %v634 = vmax.f32 %v568, 0.0
      %v635 = vmax.f32 %v571, 0.0
      %v636 = vmax.f32 %v576, 0.0
      %v637 = vmax.f32 %v579, 0.0
      %v638 = vmax.f32 %v584, 0.0
      %v639 = vmax.f32 %v587, 0.0
      %v640 = vmax.f32 %v592, 0.0
      %v641 = vmax.f32 %v595, 0.0
      %v642 = vmax.f32 %v600, 0.0
      %v643 = vmax.f32 %v603, 0.0
      %v644 = vmax.f32 %v608, 0.0
      %v645 = vmax.f32 %v611, 0.0
      %vm646 = vcmask 195584
      %647 = vst.msk [vmem:[#allocation2] sm:$0xff] %vm646, 0.0
      %vm648 = vcmask 188416
      %649 = vst.msk [vmem:[#allocation2 + $0x8] sm:$0x1] %vm648, 0.0
      %650 = vst.msk [vmem:[#allocation2 + $0x10] sm:$0xff] %vm646, 0.0
      %651 = vst.msk [vmem:[#allocation2 + $0x18] sm:$0x1] %vm648, 0.0
      %652 = vst.msk [vmem:[#allocation2 + $0x20] sm:$0xff] %vm646, 0.0
      %653 = vst.msk [vmem:[#allocation2 + $0x28] sm:$0x1] %vm648, 0.0
      %654 = vst.msk [vmem:[#allocation2 + $0x30] sm:$0xff] %vm646, 0.0
      %655 = vst.msk [vmem:[#allocation2 + $0x38] sm:$0x1] %vm648, 0.0
      %656 = vst.msk [vmem:[#allocation2 + $0x40] sm:$0xff] %vm646, 0.0
      %657 = vst.msk [vmem:[#allocation2 + $0x48] sm:$0x1] %vm648, 0.0
      %658 = vst.msk [vmem:[#allocation2 + $0x50] sm:$0xff] %vm646, 0.0
      %659 = vst.msk [vmem:[#allocation2 + $0x58] sm:$0x1] %vm648, 0.0
      %660 = vst.msk [vmem:[#allocation2 + $0x60] sm:$0xff] %vm646, 0.0
      %661 = vst.msk [vmem:[#allocation2 + $0x68] sm:$0x1] %vm648, 0.0
      %662 = vst.msk [vmem:[#allocation2 + $0x70] sm:$0xff] %vm646, 0.0
      %663 = vst.msk [vmem:[#allocation2 + $0x78] sm:$0x1] %vm648, 0.0
      %664 = vst.msk [vmem:[#allocation2 + $0x80] sm:$0xff] %vm646, 0.0
      %665 = vst.msk [vmem:[#allocation2 + $0x88] sm:$0x1] %vm648, 0.0
      %666 = vst.msk [vmem:[#allocation2 + $0x90] sm:$0xff] %vm646, 0.0
      %667 = vst.msk [vmem:[#allocation2 + $0x98] sm:$0x1] %vm648, 0.0
      %668 = vst.msk [vmem:[#allocation2 + $0xa0] sm:$0xff] %vm646, 0.0
      %669 = vst.msk [vmem:[#allocation2 + $0xa8] sm:$0x1] %vm648, 0.0
      %670 = vst.msk [vmem:[#allocation2 + $0xb0] sm:$0xff] %vm646, 0.0
      %671 = vst.msk [vmem:[#allocation2 + $0xb8] sm:$0x1] %vm648, 0.0
      %672 = vst.msk [vmem:[#allocation2 + $0xc0] sm:$0xff] %vm646, 0.0
      %673 = vst.msk [vmem:[#allocation2 + $0xc8] sm:$0x1] %vm648, 0.0
      %674 = vst.msk [vmem:[#allocation2 + $0xd0] sm:$0xff] %vm646, 0.0
      %675 = vst.msk [vmem:[#allocation2 + $0xd8] sm:$0x1] %vm648, 0.0
      %676 = vst.msk [vmem:[#allocation2 + $0xe0] sm:$0xff] %vm646, 0.0
      %677 = vst.msk [vmem:[#allocation2 + $0xe8] sm:$0x1] %vm648, 0.0
      %678 = vst.msk [vmem:[#allocation2 + $0xf0] sm:$0xff] %vm646, 0.0
      %679 = vst.msk [vmem:[#allocation2 + $0xf8] sm:$0x1] %vm648, 0.0
      %680 = vst.msk [vmem:[#allocation2 + $0x100] sm:$0xff] %vm646, 0.0
      %681 = vst.msk [vmem:[#allocation2 + $0x108] sm:$0x1] %vm648, 0.0
      %682 = vst.msk [vmem:[#allocation2 + $0x110] sm:$0xff] %vm646, 0.0
      %683 = vst.msk [vmem:[#allocation2 + $0x118] sm:$0x1] %vm648, 0.0
      %684 = vst.msk [vmem:[#allocation2 + $0x120] sm:$0xff] %vm646, 0.0
      %685 = vst.msk [vmem:[#allocation2 + $0x128] sm:$0x1] %vm648, 0.0
      %686 = vst.msk [vmem:[#allocation2 + $0x130] sm:$0xff] %vm646, 0.0
      %687 = vst.msk [vmem:[#allocation2 + $0x138] sm:$0x1] %vm648, 0.0
      %688 = vst.msk [vmem:[#allocation2 + $0x140] sm:$0xff] %vm646, 0.0
      %689 = vst.msk [vmem:[#allocation2 + $0x148] sm:$0x1] %vm648, 0.0
      %690 = vst.msk [vmem:[#allocation2 + $0x150] sm:$0xff] %vm646, 0.0
      %691 = vst.msk [vmem:[#allocation2 + $0x158] sm:$0x1] %vm648, 0.0
      %692 = vst.msk [vmem:[#allocation2 + $0x160] sm:$0xff] %vm646, 0.0
      %693 = vst.msk [vmem:[#allocation2 + $0x168] sm:$0x1] %vm648, 0.0
      %694 = vst.msk [vmem:[#allocation2 + $0x170] sm:$0xff] %vm646, 0.0
      %695 = vst.msk [vmem:[#allocation2 + $0x178] sm:$0x1] %vm648, 0.0
      %696 = vst.msk [vmem:[#allocation2 + $0x180] sm:$0xff] %vm646, 0.0
      %697 = vst.msk [vmem:[#allocation2 + $0x188] sm:$0x1] %vm648, 0.0
      %698 = vst.msk [vmem:[#allocation2 + $0x190] sm:$0xff] %vm646, 0.0
      %699 = vst.msk [vmem:[#allocation2 + $0x198] sm:$0x1] %vm648, 0.0
      %700 = vst.msk [vmem:[#allocation2 + $0x1a0] sm:$0xff] %vm646, 0.0
      %701 = vst.msk [vmem:[#allocation2 + $0x1a8] sm:$0x1] %vm648, 0.0
      %702 = vst.msk [vmem:[#allocation2 + $0x1b0] sm:$0xff] %vm646, 0.0
      %703 = vst.msk [vmem:[#allocation2 + $0x1b8] sm:$0x1] %vm648, 0.0
      %704 = vst.msk [vmem:[#allocation2 + $0x1c0] sm:$0xff] %vm646, 0.0
      %705 = vst.msk [vmem:[#allocation2 + $0x1c8] sm:$0x1] %vm648, 0.0
      %706 = vst.msk [vmem:[#allocation2 + $0x1d0] sm:$0xff] %vm646, 0.0
      %707 = vst.msk [vmem:[#allocation2 + $0x1d8] sm:$0x1] %vm648, 0.0
      %708 = vst.msk [vmem:[#allocation2 + $0x1e0] sm:$0xff] %vm646, 0.0
      %709 = vst.msk [vmem:[#allocation2 + $0x1e8] sm:$0x1] %vm648, 0.0
      %710 = vst.msk [vmem:[#allocation2 + $0x1f0] sm:$0xff] %vm646, 0.0
      %711 = vst.msk [vmem:[#allocation2 + $0x1f8] sm:$0x1] %vm648, 0.0
      %712 = vst.msk [vmem:[#allocation2 + $0x200] sm:$0xff] %vm646, 0.0
      %713 = vst.msk [vmem:[#allocation2 + $0x208] sm:$0x1] %vm648, 0.0
      %714 = vst.msk [vmem:[#allocation2 + $0x210] sm:$0xff] %vm646, 0.0
      %715 = vst.msk [vmem:[#allocation2 + $0x218] sm:$0x1] %vm648, 0.0
      %716 = vst.msk [vmem:[#allocation2 + $0x220] sm:$0xff] %vm646, 0.0
      %717 = vst.msk [vmem:[#allocation2 + $0x228] sm:$0x1] %vm648, 0.0
      %718 = vst.msk [vmem:[#allocation2 + $0x230] sm:$0xff] %vm646, 0.0
      %719 = vst.msk [vmem:[#allocation2 + $0x238] sm:$0x1] %vm648, 0.0
      %s720 = scalar_lea.vmem [#allocation2], 432
      %721 = vst.msk [vmem:[%s720] sm:$0xff] %vm646, %v614
      %722 = vst.msk [vmem:[%s720 + $0x10] sm:$0xff] %vm646, %v615
      %723 = vst.msk [vmem:[%s720 + $0x20] sm:$0xff] %vm646, %v616
      %724 = vst.msk [vmem:[%s720 + $0x30] sm:$0xff] %vm646, %v617
      %725 = vst.msk [vmem:[%s720 + $0x40] sm:$0xff] %vm646, %v618
      %726 = vst.msk [vmem:[%s720 + $0x50] sm:$0xff] %vm646, %v619
      %727 = vst.msk [vmem:[%s720 + $0x60] sm:$0xff] %vm646, %v620
      %728 = vst.msk [vmem:[%s720 + $0x70] sm:$0xff] %vm646, %v621
      %s729 = scalar_lea.vmem [#allocation2], 288
      %730 = vst.msk [vmem:[%s729 + $0x1] sm:$0xff] %vm646, %v622
      %731 = vst.msk [vmem:[%s729 + $0x11] sm:$0xff] %vm646, %v623
      %732 = vst.msk [vmem:[%s729 + $0x21] sm:$0xff] %vm646, %v624
      %733 = vst.msk [vmem:[%s729 + $0x31] sm:$0xff] %vm646, %v625
      %734 = vst.msk [vmem:[%s729 + $0x41] sm:$0xff] %vm646, %v626
      %735 = vst.msk [vmem:[%s729 + $0x51] sm:$0xff] %vm646, %v627
      %736 = vst.msk [vmem:[%s729 + $0x61] sm:$0xff] %vm646, %v628
      %737 = vst.msk [vmem:[%s729 + $0x71] sm:$0xff] %vm646, %v629
      %s738 = scalar_lea.vmem [#allocation2], 160
      %739 = vst.msk [vmem:[%s738] sm:$0xff] %vm646, %v630
      %740 = vst.msk [vmem:[%s738 + $0x10] sm:$0xff] %vm646, %v631
      %741 = vst.msk [vmem:[%s738 + $0x20] sm:$0xff] %vm646, %v632
      %742 = vst.msk [vmem:[%s738 + $0x30] sm:$0xff] %vm646, %v633
      %743 = vst.msk [vmem:[%s738 + $0x40] sm:$0xff] %vm646, %v634
      %744 = vst.msk [vmem:[%s738 + $0x50] sm:$0xff] %vm646, %v635
      %745 = vst.msk [vmem:[%s738 + $0x60] sm:$0xff] %vm646, %v636
      %746 = vst.msk [vmem:[%s738 + $0x70] sm:$0xff] %vm646, %v637
      %s747 = scalar_lea.vmem [#allocation2], 16
      %748 = vst.msk [vmem:[%s747 + $0x1] sm:$0xff] %vm646, %v638
      %749 = vst.msk [vmem:[%s747 + $0x11] sm:$0xff] %vm646, %v639
      %750 = vst.msk [vmem:[%s747 + $0x21] sm:$0xff] %vm646, %v640
      %751 = vst.msk [vmem:[%s747 + $0x31] sm:$0xff] %vm646, %v641
      %752 = vst.msk [vmem:[%s747 + $0x41] sm:$0xff] %vm646, %v642
      %753 = vst.msk [vmem:[%s747 + $0x51] sm:$0xff] %vm646, %v643
      %754 = vst.msk [vmem:[%s747 + $0x61] sm:$0xff] %vm646, %v644
      %755 = vst.msk [vmem:[%s747 + $0x71] sm:$0xff] %vm646, %v645
      %v756 = vld [vmem:[%s3] sm:$0x7]
      %v757 = vld [vmem:[%s3 + $0x4] sm:$0x7]
      %v758 = vld [vmem:[%s3 + $0x8] sm:$0x7]
      %v759 = vld [vmem:[#allocation2] sm:$0xff]
      %v760 = vld [vmem:[#allocation2 + $0x10] sm:$0xff]
      %v761 = vld [vmem:[#allocation2 + $0x20] sm:$0xff]
      %v762 = vld [vmem:[#allocation2 + $0x30] sm:$0xff]
      %v763 = vld [vmem:[#allocation2 + $0x40] sm:$0xff]
      %v764 = vld [vmem:[#allocation2 + $0x50] sm:$0xff]
      %v765 = vld [vmem:[#allocation2 + $0x60] sm:$0xff]
      %v766 = vld [vmem:[#allocation2 + $0x70] sm:$0xff]
      %v767 = vlaneseq
      %v768 = vshrl.u32 %v767, 7
      %v769 = vsub.s32 0, %v768
      %v770 = vrot.slane %v756, %v769
      %v771 = vmul.f32 %v759, %v770
      %v772 = vmul.f32 %v760, %v770
      %v773 = vmul.f32 %v761, %v770
      %v774 = vmul.f32 %v762, %v770
      %v775 = vmul.f32 %v763, %v770
      %v776 = vmul.f32 %v764, %v770
      %v777 = vmul.f32 %v765, %v770
      %v778 = vmul.f32 %v766, %v770
      %v779 = vadd.f32 %v771, 0.0
      %v780 = vadd.f32 %v772, 0.0
      %v781 = vadd.f32 %v773, 0.0
      %v782 = vadd.f32 %v774, 0.0
      %v783 = vadd.f32 %v775, 0.0
      %v784 = vadd.f32 %v776, 0.0
      %v785 = vadd.f32 %v777, 0.0
      %v786 = vadd.f32 %v778, 0.0
      %s787 = scalar_lea.vmem [#allocation2], 144
      %v788 = vld [vmem:[%s787] sm:$0xff]
      %v789 = vld [vmem:[%s787 + $0x10] sm:$0xff]
      %v790 = vld [vmem:[%s787 + $0x20] sm:$0xff]
      %v791 = vld [vmem:[%s787 + $0x30] sm:$0xff]
      %v792 = vld [vmem:[%s787 + $0x40] sm:$0xff]
      %v793 = vld [vmem:[%s787 + $0x50] sm:$0xff]
      %v794 = vld [vmem:[%s787 + $0x60] sm:$0xff]
      %v795 = vld [vmem:[%s787 + $0x70] sm:$0xff]
      %v796 = vlaneseq
      %v797 = vshrl.u32 %v796, 7
      %v798 = vsub.s32 1, %v797
      %v799 = vrot.slane %v756, %v798
      %v800 = vmul.f32 %v788, %v799
      %v801 = vmul.f32 %v789, %v799
      %v802 = vmul.f32 %v790, %v799
      %v803 = vmul.f32 %v791, %v799
      %v804 = vmul.f32 %v792, %v799
      %v805 = vmul.f32 %v793, %v799
      %v806 = vmul.f32 %v794, %v799
      %v807 = vmul.f32 %v795, %v799
      %v808 = vadd.f32 %v779, %v800
      %v809 = vadd.f32 %v780, %v801
      %v810 = vadd.f32 %v781, %v802
      %v811 = vadd.f32 %v782, %v803
      %v812 = vadd.f32 %v783, %v804
      %v813 = vadd.f32 %v784, %v805
      %v814 = vadd.f32 %v785, %v806
      %v815 = vadd.f32 %v786, %v807
      %v816 = vld [vmem:[#allocation2 + $0x1] sm:$0xff]
      %v817 = vld [vmem:[#allocation2 + $0x11] sm:$0xff]
      %v818 = vld [vmem:[#allocation2 + $0x21] sm:$0xff]
      %v819 = vld [vmem:[#allocation2 + $0x31] sm:$0xff]
      %v820 = vld [vmem:[#allocation2 + $0x41] sm:$0xff]
      %v821 = vld [vmem:[#allocation2 + $0x51] sm:$0xff]
      %v822 = vld [vmem:[#allocation2 + $0x61] sm:$0xff]
      %v823 = vld [vmem:[#allocation2 + $0x71] sm:$0xff]
      %v824 = vlaneseq
      %v825 = vshrl.u32 %v824, 7
      %v826 = vsub.s32 2, %v825
      %v827 = vrot.slane %v756, %v826
      %v828 = vmul.f32 %v816, %v827
      %v829 = vmul.f32 %v817, %v827
      %v830 = vmul.f32 %v818, %v827
      %v831 = vmul.f32 %v819, %v827
      %v832 = vmul.f32 %v820, %v827
      %v833 = vmul.f32 %v821, %v827
      %v834 = vmul.f32 %v822, %v827
      %v835 = vmul.f32 %v823, %v827
      %v836 = vadd.f32 %v808, %v828
      %v837 = vadd.f32 %v809, %v829
      %v838 = vadd.f32 %v810, %v830
      %v839 = vadd.f32 %v811, %v831
      %v840 = vadd.f32 %v812, %v832
      %v841 = vadd.f32 %v813, %v833
      %v842 = vadd.f32 %v814, %v834
      %v843 = vadd.f32 %v815, %v835
      %v844 = vld [vmem:[%s729] sm:$0xff]
      %v845 = vld [vmem:[%s729 + $0x10] sm:$0xff]
      %v846 = vld [vmem:[%s729 + $0x20] sm:$0xff]
      %v847 = vld [vmem:[%s729 + $0x30] sm:$0xff]
      %v848 = vld [vmem:[%s729 + $0x40] sm:$0xff]
      %v849 = vld [vmem:[%s729 + $0x50] sm:$0xff]
      %v850 = vld [vmem:[%s729 + $0x60] sm:$0xff]
      %v851 = vld [vmem:[%s729 + $0x70] sm:$0xff]
      %v852 = vlaneseq
      %v853 = vshrl.u32 %v852, 7
      %v854 = vsub.s32 0, %v853
      %v855 = vrot.slane %v757, %v854
      %v856 = vmul.f32 %v844, %v855
      %v857 = vmul.f32 %v845, %v855
      %v858 = vmul.f32 %v846, %v855
      %v859 = vmul.f32 %v847, %v855
      %v860 = vmul.f32 %v848, %v855
      %v861 = vmul.f32 %v849, %v855
      %v862 = vmul.f32 %v850, %v855
      %v863 = vmul.f32 %v851, %v855
      %v864 = vadd.f32 %v836, %v856
      %v865 = vadd.f32 %v837, %v857
      %v866 = vadd.f32 %v838, %v858
      %v867 = vadd.f32 %v839, %v859
      %v868 = vadd.f32 %v840, %v860
      %v869 = vadd.f32 %v841, %v861
      %v870 = vadd.f32 %v842, %v862
      %v871 = vadd.f32 %v843, %v863
      %v872 = vld [vmem:[%s720] sm:$0xff]
      %v873 = vld [vmem:[%s720 + $0x10] sm:$0xff]
      %v874 = vld [vmem:[%s720 + $0x20] sm:$0xff]
      %v875 = vld [vmem:[%s720 + $0x30] sm:$0xff]
      %v876 = vld [vmem:[%s720 + $0x40] sm:$0xff]
      %v877 = vld [vmem:[%s720 + $0x50] sm:$0xff]
      %v878 = vld [vmem:[%s720 + $0x60] sm:$0xff]
      %v879 = vld [vmem:[%s720 + $0x70] sm:$0xff]
      %v880 = vlaneseq
      %v881 = vshrl.u32 %v880, 7
      %v882 = vsub.s32 1, %v881
      %v883 = vrot.slane %v757, %v882
      %v884 = vmul.f32 %v872, %v883
      %v885 = vmul.f32 %v873, %v883
      %v886 = vmul.f32 %v874, %v883
      %v887 = vmul.f32 %v875, %v883
      %v888 = vmul.f32 %v876, %v883
      %v889 = vmul.f32 %v877, %v883
      %v890 = vmul.f32 %v878, %v883
      %v891 = vmul.f32 %v879, %v883
      %v892 = vadd.f32 %v864, %v884
      %v893 = vadd.f32 %v865, %v885
      %v894 = vadd.f32 %v866, %v886
      %v895 = vadd.f32 %v867, %v887
      %v896 = vadd.f32 %v868, %v888
      %v897 = vadd.f32 %v869, %v889
      %v898 = vadd.f32 %v870, %v890
      %v899 = vadd.f32 %v871, %v891
      %v900 = vld [vmem:[%s729 + $0x1] sm:$0xff]
      %v901 = vld [vmem:[%s729 + $0x11] sm:$0xff]
      %v902 = vld [vmem:[%s729 + $0x21] sm:$0xff]
      %v903 = vld [vmem:[%s729 + $0x31] sm:$0xff]
      %v904 = vld [vmem:[%s729 + $0x41] sm:$0xff]
      %v905 = vld [vmem:[%s729 + $0x51] sm:$0xff]
      %v906 = vld [vmem:[%s729 + $0x61] sm:$0xff]
      %v907 = vld [vmem:[%s729 + $0x71] sm:$0xff]
      %v908 = vlaneseq
      %v909 = vshrl.u32 %v908, 7
      %v910 = vsub.s32 2, %v909
      %v911 = vrot.slane %v757, %v910
      %v912 = vmul.f32 %v900, %v911
      %v913 = vmul.f32 %v901, %v911
      %v914 = vmul.f32 %v902, %v911
      %v915 = vmul.f32 %v903, %v911
      %v916 = vmul.f32 %v904, %v911
      %v917 = vmul.f32 %v905, %v911
      %v918 = vmul.f32 %v906, %v911
      %v919 = vmul.f32 %v907, %v911
      %v920 = vadd.f32 %v892, %v912
      %v921 = vadd.f32 %v893, %v913
      %v922 = vadd.f32 %v894, %v914
      %v923 = vadd.f32 %v895, %v915
      %v924 = vadd.f32 %v896, %v916
      %v925 = vadd.f32 %v897, %v917
      %v926 = vadd.f32 %v898, %v918
      %v927 = vadd.f32 %v899, %v919
      %v928 = vld [vmem:[%s747] sm:$0xff]
      %v929 = vld [vmem:[%s747 + $0x10] sm:$0xff]
      %v930 = vld [vmem:[%s747 + $0x20] sm:$0xff]
      %v931 = vld [vmem:[%s747 + $0x30] sm:$0xff]
      %v932 = vld [vmem:[%s747 + $0x40] sm:$0xff]
      %v933 = vld [vmem:[%s747 + $0x50] sm:$0xff]
      %v934 = vld [vmem:[%s747 + $0x60] sm:$0xff]
      %v935 = vld [vmem:[%s747 + $0x70] sm:$0xff]
      %v936 = vlaneseq
      %v937 = vshrl.u32 %v936, 7
      %v938 = vsub.s32 0, %v937
      %v939 = vrot.slane %v758, %v938
      %v940 = vmul.f32 %v928, %v939
      %v941 = vmul.f32 %v929, %v939
      %v942 = vmul.f32 %v930, %v939
      %v943 = vmul.f32 %v931, %v939
      %v944 = vmul.f32 %v932, %v939
      %v945 = vmul.f32 %v933, %v939
      %v946 = vmul.f32 %v934, %v939
      %v947 = vmul.f32 %v935, %v939
      %v948 = vadd.f32 %v920, %v940
      %v949 = vadd.f32 %v921, %v941
      %v950 = vadd.f32 %v922, %v942
      %v951 = vadd.f32 %v923, %v943
      %v952 = vadd.f32 %v924, %v944
      %v953 = vadd.f32 %v925, %v945
      %v954 = vadd.f32 %v926, %v946
      %v955 = vadd.f32 %v927, %v947
      %v956 = vld [vmem:[%s738] sm:$0xff]
      %v957 = vld [vmem:[%s738 + $0x10] sm:$0xff]
      %v958 = vld [vmem:[%s738 + $0x20] sm:$0xff]
      %v959 = vld [vmem:[%s738 + $0x30] sm:$0xff]
      %v960 = vld [vmem:[%s738 + $0x40] sm:$0xff]
      %v961 = vld [vmem:[%s738 + $0x50] sm:$0xff]
      %v962 = vld [vmem:[%s738 + $0x60] sm:$0xff]
      %v963 = vld [vmem:[%s738 + $0x70] sm:$0xff]
      %v964 = vlaneseq
      %v965 = vshrl.u32 %v964, 7
      %v966 = vsub.s32 1, %v965
      %v967 = vrot.slane %v758, %v966
      %v968 = vmul.f32 %v956, %v967
      %v969 = vmul.f32 %v957, %v967
      %v970 = vmul.f32 %v958, %v967
      %v971 = vmul.f32 %v959, %v967
      %v972 = vmul.f32 %v960, %v967
      %v973 = vmul.f32 %v961, %v967
      %v974 = vmul.f32 %v962, %v967
      %v975 = vmul.f32 %v963, %v967
      %v976 = vadd.f32 %v948, %v968
      %v977 = vadd.f32 %v949, %v969
      %v978 = vadd.f32 %v950, %v970
      %v979 = vadd.f32 %v951, %v971
      %v980 = vadd.f32 %v952, %v972
      %v981 = vadd.f32 %v953, %v973
      %v982 = vadd.f32 %v954, %v974
      %v983 = vadd.f32 %v955, %v975
      %v984 = vld [vmem:[%s747 + $0x1] sm:$0xff]
      %v985 = vld [vmem:[%s747 + $0x11] sm:$0xff]
      %v986 = vld [vmem:[%s747 + $0x21] sm:$0xff]
      %v987 = vld [vmem:[%s747 + $0x31] sm:$0xff]
      %v988 = vld [vmem:[%s747 + $0x41] sm:$0xff]
      %v989 = vld [vmem:[%s747 + $0x51] sm:$0xff]
      %v990 = vld [vmem:[%s747 + $0x61] sm:$0xff]
      %v991 = vld [vmem:[%s747 + $0x71] sm:$0xff]
      %v992 = vlaneseq
      %v993 = vshrl.u32 %v992, 7
      %v994 = vsub.s32 2, %v993
      %v995 = vrot.slane %v758, %v994
      %v996 = vmul.f32 %v984, %v995
      %v997 = vmul.f32 %v985, %v995
      %v998 = vmul.f32 %v986, %v995
      %v999 = vmul.f32 %v987, %v995
      %v1000 = vmul.f32 %v988, %v995
      %v1001 = vmul.f32 %v989, %v995
      %v1002 = vmul.f32 %v990, %v995
      %v1003 = vmul.f32 %v991, %v995
      %v1004 = vadd.f32 %v976, %v996
      %v1005 = vadd.f32 %v977, %v997
      %v1006 = vadd.f32 %v978, %v998
      %v1007 = vadd.f32 %v979, %v999
      %v1008 = vadd.f32 %v980, %v1000
      %v1009 = vadd.f32 %v981, %v1001
      %v1010 = vadd.f32 %v982, %v1002
      %v1011 = vadd.f32 %v983, %v1003
      %v1012 = vld [vmem:[%s4] sm:$0x1]
      %v1014 = vlaneseq
      %v1015 = vshrl.u32 %v1014, 7
      %v1016 = vsub.s32 0, %v1015
      %v1017 = vrot.slane %v1012, %v1016
      %v1019 = vadd.f32 %v1004, %v1017
      %v1020 = vadd.f32 %v1005, %v1017
      %v1021 = vadd.f32 %v1006, %v1017
      %v1022 = vadd.f32 %v1007, %v1017
      %v1023 = vadd.f32 %v1008, %v1017
      %v1024 = vadd.f32 %v1009, %v1017
      %v1025 = vadd.f32 %v1010, %v1017
      %v1026 = vadd.f32 %v1011, %v1017
      %v1027 = vmax.f32 %v1019, 0.0
      %v1028 = vmax.f32 %v1020, 0.0
      %v1029 = vmax.f32 %v1021, 0.0
      %v1030 = vmax.f32 %v1022, 0.0
      %v1031 = vmax.f32 %v1023, 0.0
      %v1032 = vmax.f32 %v1024, 0.0
      %v1033 = vmax.f32 %v1025, 0.0
      %v1034 = vmax.f32 %v1026, 0.0
      %v1035 = vpack.c.bf16 %v1028, %v1027
      %v1036 = vpack.c.bf16 %v1030, %v1029
      %v1037 = vpack.c.bf16 %v1032, %v1031
      %v1038 = vpack.c.bf16 %v1034, %v1033
      %v1039 = vld [vmem:[%s5] sm:$0xf]
      %v1040 = vld [vmem:[%s5 + $0x4] sm:$0xf]
      %v1041 = vld [vmem:[%s5 + $0x8] sm:$0xf]
      %v1042 = vld [vmem:[%s6] sm:$0x1]
      %v1044 = vlaneseq
      %v1045 = vshrl.u32 %v1044, 7
      %v1046 = vsub.s32 0, %v1045
      %v1047 = vrot.slane %v1042, %v1046
      %v1052 = vunpack.c.l.b16 %v1039
      %v1053 = vunpack.c.l.b16 %v1040
      %v1054 = vunpack.c.l.b16 %v1041
      %v1055 = vpack.c.b16 %v1053, %v1052
      %v1056 = vpack.c.b16 %v1054, %v1054
      %v1059 = vsel %vm646, %v1035, 0
      %v1062 = vsel %vm646, %v1036, 0
      %v1065 = vsel %vm646, %v1037, 0
      %v1068 = vsel %vm646, %v1038, 0
      %vm1070 = vcmask 1043456
      %v1072 = vsel %vm1070, %v1056, 0
      %1074 = vmatprep.subr.bf16.mxu0 0
      %1075 = vmatpush1.bf16.msra.mxu0 %v1055
      %1076 = vmatprep.subr.bf16.mxu0 0
      %1077 = vmatpush1.bf16.msra.mxu0 %v1072
      %1078 = vmatprep.subr.bf16.mxu0 0
      %1079 = vmatpush1.bf16.msra.mxu0 0
      %1080 = vmatprep.subr.bf16.mxu0 0
      %1081 = vmatpush1.bf16.msra.mxu0 0
      %1082 = vmatprep.subr.bf16.mxu0 0
      %1083 = vmatpush1.bf16.msra.mxu0 0
      %1084 = vmatprep.subr.bf16.mxu0 0
      %1085 = vmatpush1.bf16.msra.mxu0 0
      %1086 = vmatprep.subr.bf16.mxu0 0
      %1087 = vmatpush1.bf16.msra.mxu0 0
      %1088 = vmatprep.subr.bf16.mxu0 0
      %1089 = vmatpush1.bf16.msra.mxu0 0
      %1090 = vmatprep.subr.bf16.mxu0 0
      %1091 = vmatpush1.bf16.msra.mxu0 0
      %1092 = vmatprep.subr.bf16.mxu0 0
      %1093 = vmatpush1.bf16.msra.mxu0 0
      %1094 = vmatprep.subr.bf16.mxu0 0
      %1095 = vmatpush1.bf16.msra.mxu0 0
      %1096 = vmatprep.subr.bf16.mxu0 0
      %1097 = vmatpush1.bf16.msra.mxu0 0
      %1098 = vmatprep.subr.bf16.mxu0 0
      %1099 = vmatpush1.bf16.msra.mxu0 0
      %1100 = vmatprep.subr.bf16.mxu0 0
      %1101 = vmatpush1.bf16.msra.mxu0 0
      %1102 = vmatprep.subr.bf16.mxu0 0
      %1103 = vmatpush1.bf16.msra.mxu0 0
      %1104 = vmatprep.subr.bf16.mxu0 0
      %1105 = vmatpush1.bf16.msra.mxu0 0
      %1106 = vmatprep.mubr.bf16.mxu0 0
      %1107 = vmatmul.mubr.bf16.gmra.mrb[0].mxu0 %v1059
      %v1108 = vpop.f32.mrb[0].mxu0
      %v1109 = vadd.f32 %v1047, %v1108
      %v1110 = vpop.f32.mrb[0].mxu0
      %v1111 = vpop.f32.mrb[0].mxu0
      %v1112 = vadd.f32 %v1047, %v1111
      %v1113 = vpop.f32.mrb[0].mxu0
      %1114 = vmatprep.mubr.bf16.mxu0 0
      %1115 = vmatmul.mubr.bf16.gmra.mrb[0].mxu0 %v1062
      %v1116 = vpop.f32.mrb[0].mxu0
      %v1117 = vadd.f32 %v1047, %v1116
      %v1118 = vpop.f32.mrb[0].mxu0
      %v1119 = vpop.f32.mrb[0].mxu0
      %v1120 = vadd.f32 %v1047, %v1119
      %v1121 = vpop.f32.mrb[0].mxu0
      %1122 = vmatprep.mubr.bf16.mxu0 0
      %1123 = vmatmul.mubr.bf16.gmra.mrb[0].mxu0 %v1065
      %v1124 = vpop.f32.mrb[0].mxu0
      %v1125 = vadd.f32 %v1047, %v1124
      %v1126 = vpop.f32.mrb[0].mxu0
      %v1127 = vpop.f32.mrb[0].mxu0
      %v1128 = vadd.f32 %v1047, %v1127
      %v1129 = vpop.f32.mrb[0].mxu0
      %1130 = vmatprep.mubr.bf16.mxu0 0
      %1131 = vmatmul.mubr.bf16.gmra.mrb[0].mxu0 %v1068
      %v1132 = vpop.f32.mrb[0].mxu0
      %v1133 = vadd.f32 %v1047, %v1132
      %v1134 = vpop.f32.mrb[0].mxu0
      %v1135 = vpop.f32.mrb[0].mxu0
      %v1136 = vadd.f32 %v1047, %v1135
      %v1137 = vpop.f32.mrb[0].mxu0
      %1138 = vdwg.mxu0
      %vm1139 = vcmask 64512
      %1140 = vst.msk [vmem:[%s278] sm:$0xff] %vm1139, %v1109
      %1141 = vst.msk [vmem:[%s278 + $0x8] sm:$0xff] %vm1139, %v1112
      %1142 = vst.msk [vmem:[%s278 + $0x10] sm:$0xff] %vm1139, %v1117
      %1143 = vst.msk [vmem:[%s278 + $0x18] sm:$0xff] %vm1139, %v1120
      %1144 = vst.msk [vmem:[%s278 + $0x20] sm:$0xff] %vm1139, %v1125
      %1145 = vst.msk [vmem:[%s278 + $0x28] sm:$0xff] %vm1139, %v1128
      %1146 = vst.msk [vmem:[%s278 + $0x30] sm:$0xff] %vm1139, %v1133
      %1147 = vst.msk [vmem:[%s278 + $0x38] sm:$0xff] %vm1139, %v1136
      %p1148 = scmp.lt.s32.totalorder %s18, 1
      %s1149 = scalar_select %p1148, %s18, 1
      %s1150 = smul.addr %s1149, 8
      %s1151 = smul.addr %s1150, 8
      %s1152 = scalar_lea.vmem %s7, %s1151
      // Predicated region
      $region49: #{linear_bottleneck.1} parent=47 // pred_check
        %p1153 = pneg %p188
      $region50: #{linear_bottleneck.1} parent=47 // pred_check_branch
        %1155 = sbr.rel (%p1153) target = $region52
      $region51: #{linear_bottleneck.1} parent=47 // pred_region
        _
      $region52: #{linear_bottleneck.1} parent=47 // pred_fallthru
        _
    $region48: #{linear_bottleneck.1} parent=5 // pred_fallthru
      _
    %p1156 = scmp.le.s32.totalorder 2, %s13
    // Predicated region
    $region53: #{linear_bottleneck.1} parent=5 // pred_check
      %p1157 = pneg %p1156
    $region54: #{linear_bottleneck.1} parent=5 // pred_check_branch
      %1159 = sbr.rel (%p1157) target = $region56
    $region55: #{linear_bottleneck.1} parent=5 // pred_region
      %s1160 = ssub.s32 %s13, 2
      // Predicated region
      $region57: #{linear_bottleneck.1} parent=55 // pred_check
        %p1161 = pneg %p194
      $region58: #{linear_bottleneck.1} parent=55 // pred_check_branch
        %1163 = sbr.rel (%p1161) target = $region60
      $region59: #{linear_bottleneck.1} parent=55 // pred_region
        %p1164 = scmp.lt.s32.totalorder %s19, 1
        %s1165 = scalar_select %p1164, %s19, 1
        %s1166 = smul.addr %s1165, 8
        %s1167 = smul.addr %s1166, 8
        %s1168 = scalar_lea.vmem %s7, %s1167
      $region60: #{linear_bottleneck.1} parent=55 // pred_fallthru
        _
    $region56: #{linear_bottleneck.1} parent=5 // pred_fallthru
      _
  $region6: #{linear_bottleneck.1} parent=0 // loop_footer
    %s17 = sadd.s32 1, %s13
  $region7: #{linear_bottleneck.1} parent=0 // loop_footer_branch
    %12 = sbr.rel target = $region3
  $region8: #{linear_bottleneck.1} parent=0 // loop_exit
    _

</llo_original>
